<compile_context>
chip_gen: v7x
topology: tpu7x:2x2x1
jax: 0.10.0
libtpu: 0.0.40
codegen_flags: <defaults>
</compile_context>

<pallas_src>
import math
import functools

import jax
import jax.numpy as jnp
from jax.experimental import pallas as pl
from jax.experimental.pallas import tpu as pltpu


def _round_up(v: int, m: int) -> int:
    return ((v + m - 1) // m) * m


def _cdiv(a: int, b: int) -> int:
    return (a + b - 1) // b


# --------------------------------------------------------------------------
# Stage 1: h = LorentzLinear(x) for one row tile (eval mode, nonlin=None).
# --------------------------------------------------------------------------
def lorentz_linear_kernel(scale_ref, x_ref, wt_ref, b_ref, h_ref):
    """scale_ref : SMEM (1,1) f32          exp(self.scale)
       x_ref     : VMEM [TK, D_in]   f32   row tile of node features (unpadded D_in)
       wt_ref    : VMEM [D_in, D_out_p] f32 resident W^T (zero padded cols)
       b_ref     : VMEM [1, D_out_p] f32   resident bias (zero padded)
       h_ref     : VMEM [TK, D_out_p]      output (agg dtype)
    """
    h_lin = jnp.dot(x_ref[...], wt_ref[...],
                    preferred_element_type=jnp.float32) + b_ref[...]
    scale_exp = scale_ref[0, 0]

    t0 = h_lin[:, 0:1]
    time = jax.nn.sigmoid(t0) * scale_exp + 1.1

    # Direct masked sum over the narrow columns (no sq_all - t0^2 cancellation).
    col = jax.lax.broadcasted_iota(jnp.int32, h_lin.shape, 1)
    narrow = jnp.where(col == 0, 0.0, h_lin)
    sq_narrow = jnp.sum(narrow * narrow, axis=-1, keepdims=True)
    # sqrt(scale) = sqrt(time^2 - 1) * rsqrt(clamp(||x_narrow||^2)) : EUP rsqrt.
    sqrt_sc = jnp.sqrt(time * time - 1.0) * jax.lax.rsqrt(
        jnp.maximum(sq_narrow, 1e-8))

    h = jnp.where(col == 0, time, narrow * sqrt_sc)
    h_ref[...] = h.astype(h_ref.dtype)


# --------------------------------------------------------------------------
# Stage 2: support = adj @ h (tiled, f32 accumulate) + Lorentz normalization.
# --------------------------------------------------------------------------
def lorentz_agg_kernel(adj_ref, h_ref, o_ref, acc_ref):
    """adj_ref : VMEM [TM, TK]        adjacency tile (agg dtype)
       h_ref   : VMEM [TK, D_out_p]   h k-block (agg dtype)
       o_ref   : VMEM [TM, D_out_p]   f32 output row tile (written at last k)
       acc_ref : VMEM [TM, D_out_p]   f32 accumulator scratch
    """
    k = pl.program_id(1)

    @pl.when(k == 0)
    def _init():
        acc_ref[...] = jnp.zeros_like(acc_ref)

    acc_ref[...] += jnp.dot(adj_ref[...], h_ref[...],
                            preferred_element_type=jnp.float32)

    @pl.when(k == pl.num_programs(1) - 1)
    def _finalize():
        support = acc_ref[...]
        s0 = support[:, 0:1]
        s_sq_all = jnp.sum(support * support, axis=-1, keepdims=True)
        minus_inner = 2.0 * s0 * s0 - s_sq_all          # = -<s, s>_Lorentz
        inv_denorm = jax.lax.rsqrt(jnp.maximum(jnp.abs(minus_inner), 1e-8))
        o_ref[...] = (support * inv_denorm).astype(o_ref.dtype)


@functools.partial(jax.jit, static_argnames=("block_m", "block_k", "agg_dtype"))
def lorentz_graph_convolution(x, adj, wt, bias, scale_exp, *,
                              block_m=512, block_k=2048,
                              agg_dtype=jnp.bfloat16):
    """Fused LorentzLinear + LorentzAgg (use_att=False), eval mode."""
    n, d_in = x.shape
    d_out = wt.shape[1]
    d_out_p = _round_up(d_out, 128)          # lane-dense output features

    # --- tile selection: rows and cols padded independently (no lcm blow-up).
    #     Keep >= 2 row tiles when possible so the "parallel" axis can shard
    #     across v7x's two TensorCores.
    n8 = _round_up(n, 8)
    m_tiles = max(_cdiv(n8, block_m), 2 if n8 >= 16 else 1)
    bm = _round_up(_cdiv(n8, m_tiles), 8)
    n_rows_p = bm * m_tiles

    n128 = _round_up(n, 128)
    k_tiles = _cdiv(n128, block_k)
    bk = _round_up(_cdiv(n128, k_tiles), 128)
    n_cols_p = bk * k_tiles

    f32 = jnp.float32
    x_p = jnp.pad(x.astype(f32), ((0, n_cols_p - n), (0, 0)))        # D_in unpadded
    wt_p = jnp.pad(wt.astype(f32), ((0, 0), (0, d_out_p - d_out)))
    b_p = jnp.pad(bias.astype(f32), ((0, 0), (0, d_out_p - d_out)))
    adj_p = jnp.pad(adj.astype(f32),
                    ((0, n_rows_p - n), (0, n_cols_p - n))).astype(agg_dtype)
    scale_p = jnp.asarray(scale_exp, f32).reshape(1, 1)

    itemsize = jnp.dtype(agg_dtype).itemsize
    # Explicit VMEM limit: safe on v5e/v6e (128 MiB physical) and v7x (64 MiB).
    vmem_limit = 48 * 1024 * 1024

    # ---- Stage 1: h = LorentzLinear(x), written once to HBM in agg dtype ----
    lin_cost = pl.CostEstimate(
        flops=2 * n_cols_p * d_in * d_out_p,
        transcendentals=2 * n_cols_p,
        bytes_accessed=(n_cols_p * d_in * 4 + d_in * d_out_p * 4
                        + n_cols_p * d_out_p * itemsize),
    )
    h_p = pl.pallas_call(
        lorentz_linear_kernel,
        out_shape=jax.ShapeDtypeStruct((n_cols_p, d_out_p), agg_dtype),
        grid_spec=pltpu.PrefetchScalarGridSpec(
            num_scalar_prefetch=0,
            grid=(n_cols_p // bk,),
            in_specs=[
                pl.BlockSpec((1, 1), lambda i: (0, 0),
                             memory_space=pltpu.MemorySpace.SMEM),     # scale
                pl.BlockSpec((bk, d_in), lambda i: (i, 0)),            # x row tile
                pl.BlockSpec((d_in, d_out_p), lambda i: (0, 0)),       # W^T
                pl.BlockSpec((1, d_out_p), lambda i: (0, 0)),          # bias
            ],
            out_specs=pl.BlockSpec((bk, d_out_p), lambda i: (i, 0)),
        ),
        compiler_params=pltpu.CompilerParams(
            dimension_semantics=("parallel",),
            vmem_limit_bytes=vmem_limit),
        cost_estimate=lin_cost,
    )(scale_p, x_p, wt_p, b_p)

    # ---- Stage 2: support = adj @ h, Lorentz-normalized rows ----
    agg_cost = pl.CostEstimate(
        flops=2 * n_rows_p * n_cols_p * d_out_p,
        transcendentals=n_rows_p,
        bytes_accessed=(n_rows_p * n_cols_p * itemsize
                        + m_tiles * n_cols_p * d_out_p * itemsize
                        + n_rows_p * d_out_p * 4),
    )
    out_p = pl.pallas_call(
        lorentz_agg_kernel,
        out_shape=jax.ShapeDtypeStruct((n_rows_p, d_out_p), jnp.float32),
        grid_spec=pltpu.PrefetchScalarGridSpec(
            num_scalar_prefetch=0,
            grid=(m_tiles, k_tiles),
            in_specs=[
                pl.BlockSpec((bm, bk), lambda i, k: (i, k)),        # adj tile
                pl.BlockSpec((bk, d_out_p), lambda i, k: (k, 0)),   # h k-block
            ],
            out_specs=pl.BlockSpec((bm, d_out_p), lambda i, k: (i, 0)),
            scratch_shapes=[pltpu.VMEM((bm, d_out_p), jnp.float32)],
        ),
        compiler_params=pltpu.CompilerParams(
            dimension_semantics=("parallel", "arbitrary"),
            vmem_limit_bytes=vmem_limit),
        cost_estimate=agg_cost,
    )(adj_p, h_p)

    return out_p[:n, :d_out]


def reference_forward(x, adj, wt, bias, scale_exp):
    """Pure-JAX mirror of the PyTorch forward (eval mode, use_att=False)."""
    h_lin = x @ wt + bias
    x_narrow = h_lin[:, 1:]
    time = jax.nn.sigmoid(h_lin[:, 0:1]) * scale_exp + 1.1
    sc = (time * time - 1.0) / jnp.maximum(
        jnp.sum(x_narrow * x_narrow, axis=-1, keepdims=True), 1e-8)
    h = jnp.concatenate([time, x_narrow * jnp.sqrt(sc)], axis=-1)
    support = adj @ h
    # Lorentz inner <s,s>_L = -s0^2 + sum_{i>=1} si^2 ; denorm = sqrt(|-inner|)
    minus_inner = support[:, 0:1] ** 2 - jnp.sum(
        support[:, 1:] ** 2, axis=-1, keepdims=True)
    denorm = jnp.sqrt(jnp.maximum(jnp.abs(minus_inner), 1e-8))
    return support / denorm


if __name__ == "__main__":
    key = jax.random.PRNGKey(0)
    k_x, k_w, k_adj = jax.random.split(key, 3)

    N = 200                       # number of graph nodes
    D_IN = 32                     # hidden_features
    NUM_ASSIGN = 16
    D_OUT = NUM_ASSIGN + 1        # 17, as in LorentzAssignment.assign_linear

    # ---- deterministic params (mirrors LorentzLinear.reset_parameters) ----
    stdv = 1.0 / math.sqrt(D_OUT)
    w = jax.random.uniform(k_w, (D_OUT, D_IN), jnp.float32, -stdv, stdv)
    w = w.at[:, 0].set(0.0)                  # column 0 of W zeroed
    wt = jnp.transpose(w)                    # [D_IN, D_OUT]
    bias = jnp.zeros((1, D_OUT), jnp.float32)           # bias=False config
    scale_exp = jnp.full((1, 1), math.exp(math.log(10.0)), jnp.float32)

    # ---- deterministic inputs ----
    x = jax.random.normal(k_x, (N, D_IN), jnp.float32)
    a = (jax.random.uniform(k_adj, (N, N)) < 0.05).astype(jnp.float32)
    a = jnp.maximum(a, a.T) + jnp.eye(N, dtype=jnp.float32)
    adj = a / jnp.sum(a, axis=-1, keepdims=True)

    ref = reference_forward(x, adj, wt, bias, scale_exp[0, 0])

    # f32 path with small tiles so the (row, K) grid, the accumulator and the
    # pl.when init/finalize paths are exercised (grid = (2, 2)); tight check.
    out_f32 = lorentz_graph_convolution(
        x, adj, wt, bias, scale_exp,
        block_m=128, block_k=128, agg_dtype=jnp.float32)
    out_f32 = jax.block_until_ready(out_f32)
    assert out_f32.shape == (N, D_OUT)
    assert bool(jnp.all(jnp.isfinite(out_f32)))
    assert jnp.allclose(out_f32, ref, atol=1e-3, rtol=1e-3), "f32 path mismatch"

    # Default (production) path: large tiles, bf16 h + bf16 adj streams
    # (halves the dominant N^2 HBM traffic); looser tolerance for bf16 rounding.
    out_bf16 = lorentz_graph_convolution(x, adj, wt, bias, scale_exp)
    out_bf16 = jax.block_until_ready(out_bf16)
    assert out_bf16.shape == (N, D_OUT)
    assert bool(jnp.all(jnp.isfinite(out_bf16)))
    assert jnp.allclose(out_bf16, ref, atol=6e-2, rtol=6e-2), "bf16 path mismatch"

    print("KERNEL_OK")
</pallas_src>

<mosaic_0001>
module attributes {stable_mosaic.version = 11 : i64} {
  func.func @lorentz_agg_kernel(%arg0: i32, %arg1: i32, %arg2: memref<104x128xf32, #tpu.memory_space<vmem>>, %arg3: memref<128x128xf32, #tpu.memory_space<vmem>>, %arg4: memref<104x128xf32, #tpu.memory_space<vmem>>, %arg5: memref<104x128xf32, #tpu.memory_space<vmem>>) attributes {dimension_semantics = [#tpu.dimension_semantics<parallel>, #tpu.dimension_semantics<arbitrary>], iteration_bounds = array<i64: 2, 2>, scalar_prefetch = 0 : i64, scratch_operands = 1 : i64, tpu.core_type = #tpu.core_type<tc>, window_params = [{transform_indices = @transform_0, window_bounds = array<i64: 104, 128>}, {transform_indices = @transform_1, window_bounds = array<i64: 128, 128>}, {transform_indices = @transform_2, window_bounds = array<i64: 104, 128>}]} {
    %c0_i32 = arith.constant 0 : i32
    %0 = arith.cmpi eq, %arg1, %c0_i32 : i32
    %1 = arith.extui %0 : i1 to i32
    %c0_i32_0 = arith.constant 0 : i32
    %2 = arith.cmpi ne, %1, %c0_i32_0 : i32
    scf.if %2 {
      %cst_9 = arith.constant 0.000000e+00 : f32
      %12 = vector.broadcast %cst_9 : f32 to vector<104x128xf32>
      %c0_10 = arith.constant 0 : index
      %c0_11 = arith.constant 0 : index
      %13 = vector.load %arg5[%c0_10, %c0_11] : memref<104x128xf32, #tpu.memory_space<vmem>>, vector<104x128xf32>
      tpu.vector_store %arg5[%c0_10, %c0_11], %12 {strides = array<i32>} : memref<104x128xf32, #tpu.memory_space<vmem>>, vector<104x128xf32>,
    } else {
    }
    %c0 = arith.constant 0 : index
    %c0_1 = arith.constant 0 : index
    %3 = vector.load %arg5[%c0, %c0_1] : memref<104x128xf32, #tpu.memory_space<vmem>>, vector<104x128xf32>
    %c0_2 = arith.constant 0 : index
    %c0_3 = arith.constant 0 : index
    %4 = vector.load %arg2[%c0_2, %c0_3] : memref<104x128xf32, #tpu.memory_space<vmem>>, vector<104x128xf32>
    %c0_4 = arith.constant 0 : index
    %c0_5 = arith.constant 0 : index
    %5 = vector.load %arg3[%c0_4, %c0_5] : memref<128x128xf32, #tpu.memory_space<vmem>>, vector<128x128xf32>
    %cst = arith.constant dense<0.000000e+00> : vector<104x128xf32>
    %6 = tpu.matmul %4, %5, %cst {dimension_numbers = #tpu.dot_dimension_numbers<[1], [0], [0], [1], [0, 0, 1, 1], [], []>} : vector<104x128xf32>, vector<128x128xf32>, vector<104x128xf32> -> vector<104x128xf32>
    %7 = arith.addf %3, %6 : vector<104x128xf32>
    %c0_6 = arith.constant 0 : index
    %c0_7 = arith.constant 0 : index
    %8 = vector.load %arg5[%c0_6, %c0_7] : memref<104x128xf32, #tpu.memory_space<vmem>>, vector<104x128xf32>
    tpu.vector_store %arg5[%c0_6, %c0_7], %7 {strides = array<i32>} : memref<104x128xf32, #tpu.memory_space<vmem>>, vector<104x128xf32>,
    %c1_i32 = arith.constant 1 : i32
    %9 = arith.cmpi eq, %arg1, %c1_i32 : i32
    %10 = arith.extui %9 : i1 to i32
    %c0_i32_8 = arith.constant 0 : i32
    %11 = arith.cmpi ne, %10, %c0_i32_8 : i32
    scf.if %11 {
      %c0_9 = arith.constant 0 : index
      %c0_10 = arith.constant 0 : index
      %12 = vector.load %arg5[%c0_9, %c0_10] : memref<104x128xf32, #tpu.memory_space<vmem>>, vector<104x128xf32>
      %13 = vector.extract_strided_slice %12 {offsets = [0, 0], sizes = [104, 1], strides = [1, 1]} : vector<104x128xf32> to vector<104x1xf32>
      %14 = arith.mulf %12, %12 : vector<104x128xf32>
      %cst_11 = arith.constant dense<0.000000e+00> : vector<104xf32>
      %15 = vector.multi_reduction <add>, %14, %cst_11 [1] : vector<104x128xf32> to vector<104xf32>
      %16 = vector.shape_cast %15 : vector<104xf32> to vector<104x1xf32>
      %cst_12 = arith.constant 2.000000e+00 : f32
      %17 = vector.broadcast %cst_12 : f32 to vector<104x1xf32>
      %18 = arith.mulf %17, %13 : vector<104x1xf32>
      %19 = arith.mulf %18, %13 : vector<104x1xf32>
      %20 = arith.subf %19, %16 : vector<104x1xf32>
      %21 = math.absf %20 : vector<104x1xf32>
      %cst_13 = arith.constant 9.99999993E-9 : f32
      %22 = vector.broadcast %cst_13 : f32 to vector<104x1xf32>
      %23 = arith.maximumf %21, %22 : vector<104x1xf32>
      %24 = math.rsqrt %23 : vector<104x1xf32>
      %25 = vector.broadcast %24 : vector<104x1xf32> to vector<104x128xf32>
      %26 = arith.mulf %12, %25 : vector<104x128xf32>
      %c0_14 = arith.constant 0 : index
      %c0_15 = arith.constant 0 : index
      %27 = vector.load %arg4[%c0_14, %c0_15] : memref<104x128xf32, #tpu.memory_space<vmem>>, vector<104x128xf32>
      tpu.vector_store %arg4[%c0_14, %c0_15], %26 {strides = array<i32>} : memref<104x128xf32, #tpu.memory_space<vmem>>, vector<104x128xf32>,
    } else {
    }
    return
  }
  func.func @transform_0(%arg0: i32, %arg1: i32) -> (i32, i32) {
    %c0_i32 = arith.constant 0 : i32
    return %arg0, %arg1 : i32, i32
  }
  func.func @transform_1(%arg0: i32, %arg1: i32) -> (i32, i32) {
    %c0_i32 = arith.constant 0 : i32
    %c0_i32_0 = arith.constant 0 : i32
    return %arg1, %c0_i32 : i32, i32
  }
  func.func @transform_2(%arg0: i32, %arg1: i32) -> (i32, i32) {
    %c0_i32 = arith.constant 0 : i32
    %c0_i32_0 = arith.constant 0 : i32
    return %arg0, %c0_i32 : i32, i32
  }
}

module attributes {stable_mosaic.version = 11 : i64} {
  func.func @lorentz_linear_kernel(%arg0: i32, %arg1: memref<1x1xf32, #tpu.memory_space<smem>>, %arg2: memref<128x32xf32, #tpu.memory_space<vmem>>, %arg3: memref<32x128xf32, #tpu.memory_space<vmem>>, %arg4: memref<1x128xf32, #tpu.memory_space<vmem>>, %arg5: memref<128x128xf32, #tpu.memory_space<vmem>>) attributes {dimension_semantics = [#tpu.dimension_semantics<parallel>], iteration_bounds = array<i64: 2>, scalar_prefetch = 0 : i64, scratch_operands = 0 : i64, tpu.core_type = #tpu.core_type<tc>, window_params = [{transform_indices = @transform_0, window_bounds = array<i64: 1, 1>}, {transform_indices = @transform_1, window_bounds = array<i64: 128, 32>}, {pipeline_mode = #tpu.pipeline_mode<synchronous>, transform_indices = @transform_2, window_bounds = array<i64: 32, 128>}, {pipeline_mode = #tpu.pipeline_mode<synchronous>, transform_indices = @transform_3, window_bounds = array<i64: 1, 128>}, {transform_indices = @transform_4, window_bounds = array<i64: 128, 128>}]} {
    %c0 = arith.constant 0 : index
    %c0_0 = arith.constant 0 : index
    %0 = vector.load %arg2[%c0, %c0_0] : memref<128x32xf32, #tpu.memory_space<vmem>>, vector<128x32xf32>
    %c0_1 = arith.constant 0 : index
    %c0_2 = arith.constant 0 : index
    %1 = vector.load %arg3[%c0_1, %c0_2] : memref<32x128xf32, #tpu.memory_space<vmem>>, vector<32x128xf32>
    %cst = arith.constant dense<0.000000e+00> : vector<128x128xf32>
    %2 = tpu.matmul %0, %1, %cst {dimension_numbers = #tpu.dot_dimension_numbers<[1], [0], [0], [1], [0, 0, 1, 1], [], []>} : vector<128x32xf32>, vector<32x128xf32>, vector<128x128xf32> -> vector<128x128xf32>
    %c0_3 = arith.constant 0 : index
    %c0_4 = arith.constant 0 : index
    %3 = vector.load %arg4[%c0_3, %c0_4] : memref<1x128xf32, #tpu.memory_space<vmem>>, vector<1x128xf32>
    %4 = vector.broadcast %3 : vector<1x128xf32> to vector<128x128xf32>
    %5 = arith.addf %2, %4 : vector<128x128xf32>
    %c0_5 = arith.constant 0 : index
    %c0_6 = arith.constant 0 : index
    %6 = memref.load %arg1[%c0_5, %c0_6] : memref<1x1xf32, #tpu.memory_space<smem>>
    %7 = vector.extract_strided_slice %5 {offsets = [0, 0], sizes = [128, 1], strides = [1, 1]} : vector<128x128xf32> to vector<128x1xf32>
    %8 = arith.negf %7 : vector<128x1xf32>
    %9 = math.exp %8 : vector<128x1xf32>
    %cst_7 = arith.constant 1.000000e+00 : f32
    %10 = vector.broadcast %cst_7 : f32 to vector<128x1xf32>
    %11 = arith.addf %10, %9 : vector<128x1xf32>
    %12 = arith.divf %10, %11 : vector<128x1xf32>
    %13 = vector.broadcast %6 : f32 to vector<128x1xf32>
    %14 = arith.mulf %12, %13 : vector<128x1xf32>
    %cst_8 = arith.constant 1.100000e+00 : f32
    %15 = vector.broadcast %cst_8 : f32 to vector<128x1xf32>
    %16 = arith.addf %14, %15 : vector<128x1xf32>
    %17 = tpu.iota {dimensions = array<i32: 1>} : vector<128x128xi32>
    %c0_i32 = arith.constant 0 : i32
    %18 = vector.broadcast %c0_i32 : i32 to vector<128x128xi32>
    %19 = arith.cmpi eq, %17, %18 : vector<128x128xi32>
    %cst_9 = arith.constant 0.000000e+00 : f32
    %20 = vector.broadcast %cst_9 : f32 to vector<128x128xf32>
    %21 = arith.select %19, %20, %5 : vector<128x128xi1>, vector<128x128xf32>
    %22 = arith.mulf %21, %21 : vector<128x128xf32>
    %cst_10 = arith.constant dense<0.000000e+00> : vector<128xf32>
    %23 = vector.multi_reduction <add>, %22, %cst_10 [1] : vector<128x128xf32> to vector<128xf32>
    %24 = vector.shape_cast %23 : vector<128xf32> to vector<128x1xf32>
    %25 = arith.mulf %16, %16 : vector<128x1xf32>
    %cst_11 = arith.constant 1.000000e+00 : f32
    %26 = vector.broadcast %cst_11 : f32 to vector<128x1xf32>
    %27 = arith.subf %25, %26 : vector<128x1xf32>
    %28 = math.sqrt %27 : vector<128x1xf32>
    %cst_12 = arith.constant 9.99999993E-9 : f32
    %29 = vector.broadcast %cst_12 : f32 to vector<128x1xf32>
    %30 = arith.maximumf %24, %29 : vector<128x1xf32>
    %31 = math.rsqrt %30 : vector<128x1xf32>
    %32 = arith.mulf %28, %31 : vector<128x1xf32>
    %c0_i32_13 = arith.constant 0 : i32
    %33 = vector.broadcast %c0_i32_13 : i32 to vector<128x128xi32>
    %34 = arith.cmpi eq, %17, %33 : vector<128x128xi32>
    %35 = vector.broadcast %32 : vector<128x1xf32> to vector<128x128xf32>
    %36 = arith.mulf %21, %35 : vector<128x128xf32>
    %37 = vector.shape_cast %16 : vector<128x1xf32> to vector<128x1xf32>
    %38 = vector.broadcast %37 : vector<128x1xf32> to vector<128x128xf32>
    %39 = arith.select %34, %38, %36 : vector<128x128xi1>, vector<128x128xf32>
    %c0_14 = arith.constant 0 : index
    %c0_15 = arith.constant 0 : index
    %40 = vector.load %arg5[%c0_14, %c0_15] : memref<128x128xf32, #tpu.memory_space<vmem>>, vector<128x128xf32>
    tpu.vector_store %arg5[%c0_14, %c0_15], %39 {strides = array<i32>} : memref<128x128xf32, #tpu.memory_space<vmem>>, vector<128x128xf32>,
    return
  }
  func.func @transform_0(%arg0: i32) -> (i32, i32) {
    %c0_i32 = arith.constant 0 : i32
    %c0_i32_0 = arith.constant 0 : i32
    %c0_i32_1 = arith.constant 0 : i32
    return %c0_i32, %c0_i32_0 : i32, i32
  }
  func.func @transform_1(%arg0: i32) -> (i32, i32) {
    %c0_i32 = arith.constant 0 : i32
    %c0_i32_0 = arith.constant 0 : i32
    return %arg0, %c0_i32 : i32, i32
  }
  func.func @transform_2(%arg0: i32) -> (i32, i32) {
    %c0_i32 = arith.constant 0 : i32
    %c0_i32_0 = arith.constant 0 : i32
    %c0_i32_1 = arith.constant 0 : i32
    return %c0_i32, %c0_i32_0 : i32, i32
  }
  func.func @transform_3(%arg0: i32) -> (i32, i32) {
    %c0_i32 = arith.constant 0 : i32
    %c0_i32_0 = arith.constant 0 : i32
    %c0_i32_1 = arith.constant 0 : i32
    return %c0_i32, %c0_i32_0 : i32, i32
  }
  func.func @transform_4(%arg0: i32) -> (i32, i32) {
    %c0_i32 = arith.constant 0 : i32
    %c0_i32_0 = arith.constant 0 : i32
    return %arg0, %c0_i32 : i32, i32
  }
}

</mosaic_0001>

<llo_original>
// kernel: lorentz_graph_convolution.3
$region0: #{lorentz_graph_convolution.3}
  #allocation0 [shape = 'u32[]', space=smem, size = 0x4, offset = 0x4, fixed_abs, tag = 'smem constant byte address 0x4 - core index']
  #allocation1 [shape = 'u32[144,128]{1,0:T(1,128)}', space=vmem, size = 0x12000, scoped, tag = 'internal scratch']
  #allocation2 [shape = 'f32[104,128]{1,0:T(8,128)}', space=vmem, size = 0xd000, scoped, tag = 'scratch operand']
  %s0 = inlined_call_operand.vmem [shape: f32[208,256], index: 0, kind: input, shape index: {}]
  %s1 = inlined_call_operand.vmem [shape: f32[256,128], index: 1, kind: input, shape index: {}]
  %s2 = inlined_call_operand.vmem [shape: f32[208,128], index: 2, kind: output, shape index: {}]
  %s3 = sld [smem:[#allocation0]]
  $region87: #{lorentz_graph_convolution.3} parent=0
    _
  %s5 = ssub.s32 1, %s3
  %s6 = scalar_select 0, %s5, %s3
  $region1: #{lorentz_graph_convolution.3} parent=0
    #allocation3 [shape = 'u8[106496]{0}', space=vmem, size = 0x1a000, scoped, tag = 'input window, operand 0']
    loop: start=0, step=1, limit=6
    $region2: #{lorentz_graph_convolution.3} parent=1 // loop_pre_header
      _
    $region3: #{lorentz_graph_convolution.3} parent=1 // loop_header
      %s8 = sphi 0, %s12
      %p9 = scmp.ge.s32.totalorder %s8, 6
      %s15 = sphi 0, %s27
      %s16 = sphi 0, %s23
      %s17 = sphi 0, %s15
      %s18 = sphi 0, %s16
      %s19 = sphi 0, %s17
      %s20 = sphi 0, %s18
      %s32 = sphi 0, %s34
      %s35 = sphi 0, %s32
      %s36 = sphi 0, %s35
      %s52 = sphi 0, %s36
      %s58 = sphi 0, %s60
      %s61 = sphi 0, %s58
      %s62 = sphi 0, %s61
      %s78 = sphi 0, %s62
      %s84 = sphi 0, %s86
      %s87 = sphi 0, %s84
      %s88 = sphi 0, %s87
      %s104 = sphi 0, %s88
    $region4: #{lorentz_graph_convolution.3} parent=1 // loop_header_branch
      %11 = sbr.rel (%p9) target = $region8
    $region5: #{lorentz_graph_convolution.3} parent=1 // loop_body
      %s13 = ssub.s32 %s8, 1
      %s14 = ssub.s32 %s8, 2
      %s21 = sadd.s32 1, %s16
      %p22 = scmp.ge.s32.totalorder %s21, 2
      %s23 = scalar_select %p22, 0, %s21
      %s24 = sadd.s32 1, %s15
      %s25 = scalar_select %p22, %s24, %s15
      %p26 = scmp.ge.s32.totalorder %s25, 2
      %s27 = scalar_select %p26, 0, %s25
      %s28 = ssub.s32 %s15, %s27
      %s29 = ssub.s32 %s16, %s23
      %s30 = sor.u32 %s28, %s29
      %p31 = scmp.eq.s32.totalorder %s30, 0
      %s33 = sadd.s32 %s32, 1
      %s34 = scalar_select %p31, %s32, %s33
      %p37 = pneg %p31
      %p38 = scmp.eq.s32.totalorder %s8, 3
      %p39 = por %p37, %p38
      %p40 = scmp.ne.s32.totalorder %s32, %s35
      %p41 = scmp.eq.s32.totalorder %s8, 0
      %p42 = por %p40, %p41
      %p43 = scmp.ne.s32.totalorder %s32, %s35
      %p44 = scmp.eq.s32.totalorder %s13, 3
      %p45 = por %p43, %p44
      %p46 = scmp.ne.s32.totalorder %s35, %s36
      %p47 = scmp.eq.s32.totalorder %s13, 0
      %p48 = por %p46, %p47
      %p49 = scmp.ne.s32.totalorder %s35, %s36
      %p50 = scmp.eq.s32.totalorder %s14, 3
      %p51 = por %p49, %p50
      %p53 = scmp.ne.s32.totalorder %s36, %s52
      %p54 = scmp.eq.s32.totalorder %s14, 0
      %p55 = por %p53, %p54
      %s56 = ssub.s32 %s16, %s23
      %p57 = scmp.eq.s32.totalorder %s56, 0
      %s59 = sadd.s32 %s58, 1
      %s60 = scalar_select %p57, %s58, %s59
      %p63 = pneg %p57
      %p64 = scmp.eq.s32.totalorder %s8, 3
      %p65 = por %p63, %p64
      %p66 = scmp.ne.s32.totalorder %s58, %s61
      %p67 = scmp.eq.s32.totalorder %s8, 0
      %p68 = por %p66, %p67
      %p69 = scmp.ne.s32.totalorder %s58, %s61
      %p70 = scmp.eq.s32.totalorder %s13, 3
      %p71 = por %p69, %p70
      %p72 = scmp.ne.s32.totalorder %s61, %s62
      %p73 = scmp.eq.s32.totalorder %s13, 0
      %p74 = por %p72, %p73
      %p75 = scmp.ne.s32.totalorder %s61, %s62
      %p76 = scmp.eq.s32.totalorder %s14, 3
      %p77 = por %p75, %p76
      %p79 = scmp.ne.s32.totalorder %s62, %s78
      %p80 = scmp.eq.s32.totalorder %s14, 0
      %p81 = por %p79, %p80
      %s82 = ssub.s32 %s15, %s27
      %p83 = scmp.eq.s32.totalorder %s82, 0
      %s85 = sadd.s32 %s84, 1
      %s86 = scalar_select %p83, %s84, %s85
      %p89 = pneg %p83
      %p90 = scmp.eq.s32.totalorder %s8, 3
      %p91 = por %p89, %p90
      %p92 = scmp.ne.s32.totalorder %s84, %s87
      %p93 = scmp.eq.s32.totalorder %s8, 0
      %p94 = por %p92, %p93
      %p95 = scmp.ne.s32.totalorder %s84, %s87
      %p96 = scmp.eq.s32.totalorder %s13, 3
      %p97 = por %p95, %p96
      %p98 = scmp.ne.s32.totalorder %s87, %s88
      %p99 = scmp.eq.s32.totalorder %s13, 0
      %p100 = por %p98, %p99
      %p101 = scmp.ne.s32.totalorder %s87, %s88
      %p102 = scmp.eq.s32.totalorder %s14, 3
      %p103 = por %p101, %p102
      %p105 = scmp.ne.s32.totalorder %s88, %s104
      %p106 = scmp.eq.s32.totalorder %s14, 0
      %p107 = por %p105, %p106
      %p108 = scmp.le.s32.totalorder 1, %s8
      %p109 = scmp.lt.s32.totalorder %s8, 5
      %p110 = pnand %p108, %p109
      %p111 = pneg %p110
      // Predicated region
      $region9: #{lorentz_graph_convolution.3} parent=5 // pred_check
        _
      $region10: #{lorentz_graph_convolution.3} parent=5 // pred_check_branch
        %113 = sbr.rel (%p110) target = $region12
      $region11: #{lorentz_graph_convolution.3} parent=5 // pred_region
        %s114 = ssub.s32 %s8, 1
      $region12: #{lorentz_graph_convolution.3} parent=5 // pred_fallthru
        _
      %p115 = scmp.lt.s32.totalorder %s8, 4
      // Predicated region
      $region13: #{lorentz_graph_convolution.3} parent=5 // pred_check
        %p116 = pneg %p115
      $region14: #{lorentz_graph_convolution.3} parent=5 // pred_check_branch
        %118 = sbr.rel (%p116) target = $region16
      $region15: #{lorentz_graph_convolution.3} parent=5 // pred_region
        // Predicated region
        $region17: #{lorentz_graph_convolution.3} parent=15 // pred_check
          %p119 = pneg %p42
        $region18: #{lorentz_graph_convolution.3} parent=15 // pred_check_branch
          %121 = sbr.rel (%p119) target = $region20
        $region19: #{lorentz_graph_convolution.3} parent=15 // pred_region
          %s122 = sand.u32 %s32, 1
          %s123 = sand.u32 %s32, 1
          %s124 = smul.addr %s123, 104
          %s125 = scalar_lea.vmem [#allocation3], %s124
          %s126 = smul.u32 13, %s15
          %s127 = smul.addr %s126, 2
          %s128 = sadd.s32 %s16, %s127
          %s129 = smul.addr %s128, 8
          %s130 = scalar_lea.vmem %s0, %s129
          // Predicated region
          $region21: #{lorentz_graph_convolution.3} parent=19 // pred_check
            _
          $region22: #{lorentz_graph_convolution.3} parent=19 // pred_check_branch
            %132 = sbr.rel (0) target = $region24
          $region23: #{lorentz_graph_convolution.3} parent=19 // pred_region
            // Predicated region
            $region25: #{lorentz_graph_convolution.3} parent=23 // pred_check
              _
            $region26: #{lorentz_graph_convolution.3} parent=23 // pred_check_branch
              %134 = sbr.rel (0) target = $region28
            $region27: #{lorentz_graph_convolution.3} parent=23 // pred_region
              // Predicated region
              $region40: #{lorentz_graph_convolution.3} parent=27 // pred_check
                _
              $region41: #{lorentz_graph_convolution.3} parent=27 // pred_check_branch
                %173 = sbr.rel (0) target = $region43
              $region42: #{lorentz_graph_convolution.3} parent=27 // pred_region
                loop: start=0, step=1, limit=1
                $region44: #{lorentz_graph_convolution.3} parent=42 // loop_pre_header
                  _
                $region45: #{lorentz_graph_convolution.3} parent=42 // loop_header
                  %s175 = sphi 0, %s179
                  %p176 = scmp.ge.s32.totalorder %s175, 1
                  %s180 = sphi %s130, %s130
                  %s181 = sphi %s125, %s125
                $region46: #{lorentz_graph_convolution.3} parent=42 // loop_header_branch
                  %178 = sbr.rel (%p176) target = $region50
                $region47: #{lorentz_graph_convolution.3} parent=42 // loop_body
                  %v182 = vld [vmem:[%s180] sm:$0xff]
                  %183 = vst [vmem:[%s181] sm:$0xff] %v182
                  %v184 = vld [vmem:[%s180 + $0x10] sm:$0xff]
                  %185 = vst [vmem:[%s181 + $0x8] sm:$0xff] %v184
                  %v186 = vld [vmem:[%s180 + $0x20] sm:$0xff]
                  %187 = vst [vmem:[%s181 + $0x10] sm:$0xff] %v186
                  %v188 = vld [vmem:[%s180 + $0x30] sm:$0xff]
                  %189 = vst [vmem:[%s181 + $0x18] sm:$0xff] %v188
                  %v190 = vld [vmem:[%s180 + $0x40] sm:$0xff]
                  %191 = vst [vmem:[%s181 + $0x20] sm:$0xff] %v190
                  %v192 = vld [vmem:[%s180 + $0x50] sm:$0xff]
                  %193 = vst [vmem:[%s181 + $0x28] sm:$0xff] %v192
                  %v194 = vld [vmem:[%s180 + $0x60] sm:$0xff]
                  %195 = vst [vmem:[%s181 + $0x30] sm:$0xff] %v194
                  %v196 = vld [vmem:[%s180 + $0x70] sm:$0xff]
                  %197 = vst [vmem:[%s181 + $0x38] sm:$0xff] %v196
                  %v198 = vld [vmem:[%s180 + $0x80] sm:$0xff]
                  %199 = vst [vmem:[%s181 + $0x40] sm:$0xff] %v198
                  %v200 = vld [vmem:[%s180 + $0x90] sm:$0xff]
                  %201 = vst [vmem:[%s181 + $0x48] sm:$0xff] %v200
                  %v202 = vld [vmem:[%s180 + $0xa0] sm:$0xff]
                  %203 = vst [vmem:[%s181 + $0x50] sm:$0xff] %v202
                  %v204 = vld [vmem:[%s180 + $0xb0] sm:$0xff]
                  %205 = vst [vmem:[%s181 + $0x58] sm:$0xff] %v204
                  %v206 = vld [vmem:[%s180 + $0xc0] sm:$0xff]
                  %207 = vst [vmem:[%s181 + $0x60] sm:$0xff] %v206
                $region48: #{lorentz_graph_convolution.3} parent=42 // loop_footer
                  %s179 = sadd.s32 1, %s175
                $region49: #{lorentz_graph_convolution.3} parent=42 // loop_footer_branch
                  %174 = sbr.rel target = $region45
                $region50: #{lorentz_graph_convolution.3} parent=42 // loop_exit
                  _
              $region43: #{lorentz_graph_convolution.3} parent=27 // pred_fallthru
                _
              // Predicated region
              $region51: #{lorentz_graph_convolution.3} parent=27 // pred_check
                _
              $region52: #{lorentz_graph_convolution.3} parent=27 // pred_check_branch
                %209 = sbr.rel target = $region54
              $region53: #{lorentz_graph_convolution.3} parent=27 // pred_region
                _
              $region54: #{lorentz_graph_convolution.3} parent=27 // pred_fallthru
                _
            $region28: #{lorentz_graph_convolution.3} parent=23 // pred_fallthru
              _
            // Predicated region
            $region29: #{lorentz_graph_convolution.3} parent=23 // pred_check
              _
            $region30: #{lorentz_graph_convolution.3} parent=23 // pred_check_branch
              %136 = sbr.rel target = $region32
            $region31: #{lorentz_graph_convolution.3} parent=23 // pred_region
              loop: start=0, step=1, limit=1
              $region33: #{lorentz_graph_convolution.3} parent=31 // loop_pre_header
                _
              $region34: #{lorentz_graph_convolution.3} parent=31 // loop_header
                %s139 = sphi 0, %s143
                %p140 = scmp.ge.s32.totalorder %s139, 1
                %s144 = sphi %s130, %s130
                %s145 = sphi %s125, %s125
              $region35: #{lorentz_graph_convolution.3} parent=31 // loop_header_branch
                %142 = sbr.rel (%p140) target = $region39
              $region36: #{lorentz_graph_convolution.3} parent=31 // loop_body
                %v146 = vld [vmem:[%s144] sm:$0xff]
                %147 = vst [vmem:[%s145] sm:$0xff] %v146
                %v148 = vld [vmem:[%s144 + $0x10] sm:$0xff]
                %149 = vst [vmem:[%s145 + $0x8] sm:$0xff] %v148
                %v150 = vld [vmem:[%s144 + $0x20] sm:$0xff]
                %151 = vst [vmem:[%s145 + $0x10] sm:$0xff] %v150
                %v152 = vld [vmem:[%s144 + $0x30] sm:$0xff]
                %153 = vst [vmem:[%s145 + $0x18] sm:$0xff] %v152
                %v154 = vld [vmem:[%s144 + $0x40] sm:$0xff]
                %155 = vst [vmem:[%s145 + $0x20] sm:$0xff] %v154
                %v156 = vld [vmem:[%s144 + $0x50] sm:$0xff]
                %157 = vst [vmem:[%s145 + $0x28] sm:$0xff] %v156
                %v158 = vld [vmem:[%s144 + $0x60] sm:$0xff]
                %159 = vst [vmem:[%s145 + $0x30] sm:$0xff] %v158
                %v160 = vld [vmem:[%s144 + $0x70] sm:$0xff]
                %161 = vst [vmem:[%s145 + $0x38] sm:$0xff] %v160
                %v162 = vld [vmem:[%s144 + $0x80] sm:$0xff]
                %163 = vst [vmem:[%s145 + $0x40] sm:$0xff] %v162
                %v164 = vld [vmem:[%s144 + $0x90] sm:$0xff]
                %165 = vst [vmem:[%s145 + $0x48] sm:$0xff] %v164
                %v166 = vld [vmem:[%s144 + $0xa0] sm:$0xff]
                %167 = vst [vmem:[%s145 + $0x50] sm:$0xff] %v166
                %v168 = vld [vmem:[%s144 + $0xb0] sm:$0xff]
                %169 = vst [vmem:[%s145 + $0x58] sm:$0xff] %v168
                %v170 = vld [vmem:[%s144 + $0xc0] sm:$0xff]
                %171 = vst [vmem:[%s145 + $0x60] sm:$0xff] %v170
              $region37: #{lorentz_graph_convolution.3} parent=31 // loop_footer
                %s143 = sadd.s32 1, %s139
              $region38: #{lorentz_graph_convolution.3} parent=31 // loop_footer_branch
                %138 = sbr.rel target = $region34
              $region39: #{lorentz_graph_convolution.3} parent=31 // loop_exit
                _
            $region32: #{lorentz_graph_convolution.3} parent=23 // pred_fallthru
              _
          $region24: #{lorentz_graph_convolution.3} parent=19 // pred_fallthru
            _
          %210 = vnop
        $region20: #{lorentz_graph_convolution.3} parent=15 // pred_fallthru
          _
        // Predicated region
        $region55: #{lorentz_graph_convolution.3} parent=15 // pred_check
          %p211 = pneg %p68
        $region56: #{lorentz_graph_convolution.3} parent=15 // pred_check_branch
          %213 = sbr.rel (%p211) target = $region58
        $region57: #{lorentz_graph_convolution.3} parent=15 // pred_region
          %s214 = smul.u32 16, %s16
          %p215 = scmp.lt.s32.totalorder %s214, 31
          %s216 = scalar_select %p215, %s214, 31
          %s217 = smul.addr %s216, 8
          %s218 = scalar_lea.vmem %s1, %s217
          %s219 = smul.u32 16, %s16
        $region58: #{lorentz_graph_convolution.3} parent=15 // pred_fallthru
          _
      $region16: #{lorentz_graph_convolution.3} parent=5 // pred_fallthru
        _
      %p220 = scmp.le.s32.totalorder 1, %s8
      %p221 = scmp.lt.s32.totalorder %s8, 5
      %p222 = pnand %p220, %p221
      %p223 = pneg %p222
      // Predicated region
      $region59: #{lorentz_graph_convolution.3} parent=5 // pred_check
        _
      $region60: #{lorentz_graph_convolution.3} parent=5 // pred_check_branch
        %225 = sbr.rel (%p222) target = $region62
      $region61: #{lorentz_graph_convolution.3} parent=5 // pred_region
        %s226 = ssub.s32 %s8, 1
        %s227 = sand.u32 %s35, 1
        %s228 = sand.u32 %s35, 1
        %s229 = smul.addr %s228, 104
        %s230 = scalar_lea.vmem [#allocation3], %s229
        // Predicated region
        $region63: #{lorentz_graph_convolution.3} parent=61 // pred_check
          %p231 = pneg %p48
        $region64: #{lorentz_graph_convolution.3} parent=61 // pred_check_branch
          %233 = sbr.rel (%p231) target = $region66
        $region65: #{lorentz_graph_convolution.3} parent=61 // pred_region
          _
        $region66: #{lorentz_graph_convolution.3} parent=61 // pred_fallthru
          _
        %s234 = sand.u32 %s35, 1
        %s235 = sand.u32 %s35, 1
        %s236 = smul.addr %s235, 104
        %s237 = scalar_lea.vmem [#allocation3], %s236
        %p238 = pneg %p48
        %p239 = pneg %p45
        %s240 = smul.u32 16, %s18
        %p241 = scmp.lt.s32.totalorder %s240, 31
        %s242 = scalar_select %p241, %s240, 31
        %s243 = smul.addr %s242, 8
        %s244 = scalar_lea.vmem %s1, %s243
        %p245 = pneg %p74
        %p246 = pneg %p71
        %p247 = pneg %p100
        %p248 = pneg %p97
        %s249 = smul.u32 13, %s17
        %p250 = scmp.lt.s32.totalorder %s249, 25
        %s251 = scalar_select %p250, %s249, 25
        %s252 = smul.addr %s251, 8
        %s253 = scalar_lea.vmem %s2, %s252
        %s254 = smul.u32 13, %s17
        %s255 = smul.u32 16, %s18
        %p256 = scmp.lt.s32.totalorder %s255, 31
        %s257 = scalar_select %p256, %s255, 31
        %s258 = smul.addr %s257, 8
        %s259 = scalar_lea.vmem %s1, %s258
        %s260 = smul.u32 16, %s18
        %s261 = smul.u32 13, %s17
        %p262 = scmp.lt.s32.totalorder %s261, 25
        %s263 = scalar_select %p262, %s261, 25
        %s264 = smul.addr %s263, 8
        %s265 = scalar_lea.vmem %s2, %s264
        %s266 = smul.u32 13, %s17
        %p267 = scmp.eq.s32.totalorder %s18, 0
        // Predicated region
        $region67: #{lorentz_graph_convolution.3} parent=61 // pred_check
          %p268 = pneg %p267
        $region68: #{lorentz_graph_convolution.3} parent=61 // pred_check_branch
          %270 = sbr.rel (%p268) target = $region70
        $region69: #{lorentz_graph_convolution.3} parent=61 // pred_region
          %271 = vst [vmem:[#allocation2] sm:$0xff] 0.0
          %272 = vst [vmem:[#allocation2 + $0x8] sm:$0xff] 0.0
          %273 = vst [vmem:[#allocation2 + $0x10] sm:$0xff] 0.0
          %274 = vst [vmem:[#allocation2 + $0x18] sm:$0xff] 0.0
          %275 = vst [vmem:[#allocation2 + $0x20] sm:$0xff] 0.0
          %276 = vst [vmem:[#allocation2 + $0x28] sm:$0xff] 0.0
          %277 = vst [vmem:[#allocation2 + $0x30] sm:$0xff] 0.0
          %278 = vst [vmem:[#allocation2 + $0x38] sm:$0xff] 0.0
          %279 = vst [vmem:[#allocation2 + $0x40] sm:$0xff] 0.0
          %280 = vst [vmem:[#allocation2 + $0x48] sm:$0xff] 0.0
          %281 = vst [vmem:[#allocation2 + $0x50] sm:$0xff] 0.0
          %282 = vst [vmem:[#allocation2 + $0x58] sm:$0xff] 0.0
          %283 = vst [vmem:[#allocation2 + $0x60] sm:$0xff] 0.0
        $region70: #{lorentz_graph_convolution.3} parent=61 // pred_fallthru
          _
        %v284 = vld [vmem:[#allocation2] sm:$0xff]
        %v285 = vld [vmem:[#allocation2 + $0x8] sm:$0xff]
        %v286 = vld [vmem:[#allocation2 + $0x10] sm:$0xff]
        %v287 = vld [vmem:[#allocation2 + $0x18] sm:$0xff]
        %v288 = vld [vmem:[#allocation2 + $0x20] sm:$0xff]
        %v289 = vld [vmem:[#allocation2 + $0x28] sm:$0xff]
        %v290 = vld [vmem:[#allocation2 + $0x30] sm:$0xff]
        %v291 = vld [vmem:[#allocation2 + $0x38] sm:$0xff]
        %v292 = vld [vmem:[#allocation2 + $0x40] sm:$0xff]
        %v293 = vld [vmem:[#allocation2 + $0x48] sm:$0xff]
        %v294 = vld [vmem:[#allocation2 + $0x50] sm:$0xff]
        %v295 = vld [vmem:[#allocation2 + $0x58] sm:$0xff]
        %v296 = vld [vmem:[#allocation2 + $0x60] sm:$0xff]
        %v297 = vld [vmem:[%s230] sm:$0xff]
        %v298 = vld [vmem:[%s230 + $0x8] sm:$0xff]
        %v299 = vld [vmem:[%s230 + $0x10] sm:$0xff]
        %v300 = vld [vmem:[%s230 + $0x18] sm:$0xff]
        %v301 = vld [vmem:[%s230 + $0x20] sm:$0xff]
        %v302 = vld [vmem:[%s230 + $0x28] sm:$0xff]
        %v303 = vld [vmem:[%s230 + $0x30] sm:$0xff]
        %v304 = vld [vmem:[%s230 + $0x38] sm:$0xff]
        %v305 = vld [vmem:[%s230 + $0x40] sm:$0xff]
        %v306 = vld [vmem:[%s230 + $0x48] sm:$0xff]
        %v307 = vld [vmem:[%s230 + $0x50] sm:$0xff]
        %v308 = vld [vmem:[%s230 + $0x58] sm:$0xff]
        %v309 = vld [vmem:[%s230 + $0x60] sm:$0xff]
        %v310 = vld [vmem:[%s259] sm:$0xff]
        %v311 = vld [vmem:[%s259 + $0x8] sm:$0xff]
        %v312 = vld [vmem:[%s259 + $0x10] sm:$0xff]
        %v313 = vld [vmem:[%s259 + $0x18] sm:$0xff]
        %v314 = vld [vmem:[%s259 + $0x20] sm:$0xff]
        %v315 = vld [vmem:[%s259 + $0x28] sm:$0xff]
        %v316 = vld [vmem:[%s259 + $0x30] sm:$0xff]
        %v317 = vld [vmem:[%s259 + $0x38] sm:$0xff]
        %v318 = vld [vmem:[%s259 + $0x40] sm:$0xff]
        %v319 = vld [vmem:[%s259 + $0x48] sm:$0xff]
        %v320 = vld [vmem:[%s259 + $0x50] sm:$0xff]
        %v321 = vld [vmem:[%s259 + $0x58] sm:$0xff]
        %v322 = vld [vmem:[%s259 + $0x60] sm:$0xff]
        %v323 = vld [vmem:[%s259 + $0x68] sm:$0xff]
        %v324 = vld [vmem:[%s259 + $0x70] sm:$0xff]
        %v325 = vld [vmem:[%s259 + $0x78] sm:$0xff]
        %326 = vmatprep.subr.mxu0 0.0
        %327 = vmatpush1.msra.mxu0 %v310
        %328 = vmatprep.subr.mxu0 0.0
        %329 = vmatpush1.msra.mxu0 %v311
        %330 = vmatprep.subr.mxu0 0.0
        %331 = vmatpush1.msra.mxu0 %v312
        %332 = vmatprep.subr.mxu0 0.0
        %333 = vmatpush1.msra.mxu0 %v313
        %334 = vmatprep.subr.mxu0 0.0
        %335 = vmatpush1.msra.mxu0 %v314
        %336 = vmatprep.subr.mxu0 0.0
        %337 = vmatpush1.msra.mxu0 %v315
        %338 = vmatprep.subr.mxu0 0.0
        %339 = vmatpush1.msra.mxu0 %v316
        %340 = vmatprep.subr.mxu0 0.0
        %341 = vmatpush1.msra.mxu0 %v317
        %342 = vmatprep.subr.mxu0 0.0
        %343 = vmatpush1.msra.mxu0 %v318
        %344 = vmatprep.subr.mxu0 0.0
        %345 = vmatpush1.msra.mxu0 %v319
        %346 = vmatprep.subr.mxu0 0.0
        %347 = vmatpush1.msra.mxu0 %v320
        %348 = vmatprep.subr.mxu0 0.0
        %349 = vmatpush1.msra.mxu0 %v321
        %350 = vmatprep.subr.mxu0 0.0
        %351 = vmatpush1.msra.mxu0 %v322
        %352 = vmatprep.subr.mxu0 0.0
        %353 = vmatpush1.msra.mxu0 %v323
        %354 = vmatprep.subr.mxu0 0.0
        %355 = vmatpush1.msra.mxu0 %v324
        %356 = vmatprep.subr.mxu0 0.0
        %357 = vmatpush1.msra.mxu0 %v325
        %358 = vmatprep.subr.mxu0 0.0
        %359 = vmatpush1.msra.mxu0 0.0
        %360 = vmatprep.subr.mxu0 0.0
        %361 = vmatpush1.msra.mxu0 0.0
        %362 = vmatprep.subr.mxu0 0.0
        %363 = vmatpush1.msra.mxu0 0.0
        %364 = vmatprep.subr.mxu0 0.0
        %365 = vmatpush1.msra.mxu0 0.0
        %366 = vmatprep.subr.mxu0 0.0
        %367 = vmatpush1.msra.mxu0 0.0
        %368 = vmatprep.subr.mxu0 0.0
        %369 = vmatpush1.msra.mxu0 0.0
        %370 = vmatprep.subr.mxu0 0.0
        %371 = vmatpush1.msra.mxu0 0.0
        %372 = vmatprep.subr.mxu0 0.0
        %373 = vmatpush1.msra.mxu0 0.0
        %374 = vmatprep.subr.mxu0 0.0
        %375 = vmatpush1.msra.mxu0 0.0
        %376 = vmatprep.subr.mxu0 0.0
        %377 = vmatpush1.msra.mxu0 0.0
        %378 = vmatprep.subr.mxu0 0.0
        %379 = vmatpush1.msra.mxu0 0.0
        %380 = vmatprep.subr.mxu0 0.0
        %381 = vmatpush1.msra.mxu0 0.0
        %382 = vmatprep.subr.mxu0 0.0
        %383 = vmatpush1.msra.mxu0 0.0
        %384 = vmatprep.subr.mxu0 0.0
        %385 = vmatpush1.msra.mxu0 0.0
        %386 = vmatprep.subr.mxu0 0.0
        %387 = vmatpush1.msra.mxu0 0.0
        %388 = vmatprep.subr.mxu0 0.0
        %389 = vmatpush1.msra.mxu0 0.0
        %390 = vmatprep.mubr.f32.mxu0 0.0
        %391 = vmatmul.mubr.f32.gmra.mrb[0].mxu0 %v297
        %v392 = vpop.f32.mrb[0].mxu0
        %v393 = vadd.f32 0.0, %v392
        %v394 = vpop.f32.mrb[0].mxu0
        %395 = vmatprep.mubr.f32.mxu0 0.0
        %396 = vmatmul.mubr.f32.gmra.mrb[0].mxu0 %v298
        %v397 = vpop.f32.mrb[0].mxu0
        %v398 = vadd.f32 0.0, %v397
        %v399 = vpop.f32.mrb[0].mxu0
        %400 = vmatprep.mubr.f32.mxu0 0.0
        %401 = vmatmul.mubr.f32.gmra.mrb[0].mxu0 %v299
        %v402 = vpop.f32.mrb[0].mxu0
        %v403 = vadd.f32 0.0, %v402
        %v404 = vpop.f32.mrb[0].mxu0
        %405 = vmatprep.mubr.f32.mxu0 0.0
        %406 = vmatmul.mubr.f32.gmra.mrb[0].mxu0 %v300
        %v407 = vpop.f32.mrb[0].mxu0
        %v408 = vadd.f32 0.0, %v407
        %v409 = vpop.f32.mrb[0].mxu0
        %410 = vmatprep.mubr.f32.mxu0 0.0
        %411 = vmatmul.mubr.f32.gmra.mrb[0].mxu0 %v301
        %v412 = vpop.f32.mrb[0].mxu0
        %v413 = vadd.f32 0.0, %v412
        %v414 = vpop.f32.mrb[0].mxu0
        %415 = vmatprep.mubr.f32.mxu0 0.0
        %416 = vmatmul.mubr.f32.gmra.mrb[0].mxu0 %v302
        %v417 = vpop.f32.mrb[0].mxu0
        %v418 = vadd.f32 0.0, %v417
        %v419 = vpop.f32.mrb[0].mxu0
        %420 = vmatprep.mubr.f32.mxu0 0.0
        %421 = vmatmul.mubr.f32.gmra.mrb[0].mxu0 %v303
        %v422 = vpop.f32.mrb[0].mxu0
        %v423 = vadd.f32 0.0, %v422
        %v424 = vpop.f32.mrb[0].mxu0
        %425 = vmatprep.mubr.f32.mxu0 0.0
        %426 = vmatmul.mubr.f32.gmra.mrb[0].mxu0 %v304
        %v427 = vpop.f32.mrb[0].mxu0
        %v428 = vadd.f32 0.0, %v427
        %v429 = vpop.f32.mrb[0].mxu0
        %430 = vmatprep.mubr.f32.mxu0 0.0
        %431 = vmatmul.mubr.f32.gmra.mrb[0].mxu0 %v305
        %v432 = vpop.f32.mrb[0].mxu0
        %v433 = vadd.f32 0.0, %v432
        %v434 = vpop.f32.mrb[0].mxu0
        %435 = vmatprep.mubr.f32.mxu0 0.0
        %436 = vmatmul.mubr.f32.gmra.mrb[0].mxu0 %v306
        %v437 = vpop.f32.mrb[0].mxu0
        %v438 = vadd.f32 0.0, %v437
        %v439 = vpop.f32.mrb[0].mxu0
        %440 = vmatprep.mubr.f32.mxu0 0.0
        %441 = vmatmul.mubr.f32.gmra.mrb[0].mxu0 %v307
        %v442 = vpop.f32.mrb[0].mxu0
        %v443 = vadd.f32 0.0, %v442
        %v444 = vpop.f32.mrb[0].mxu0
        %445 = vmatprep.mubr.f32.mxu0 0.0
        %446 = vmatmul.mubr.f32.gmra.mrb[0].mxu0 %v308
        %v447 = vpop.f32.mrb[0].mxu0
        %v448 = vadd.f32 0.0, %v447
        %v449 = vpop.f32.mrb[0].mxu0
        %450 = vmatprep.mubr.f32.mxu0 0.0
        %451 = vmatmul.mubr.f32.gmra.mrb[0].mxu0 %v309
        %v452 = vpop.f32.mrb[0].mxu0
        %v453 = vadd.f32 0.0, %v452
        %v454 = vpop.f32.mrb[0].mxu0
        %455 = vdwg.mxu0
        %v456 = vadd.f32 %v284, %v393
        %v457 = vadd.f32 %v285, %v398
        %v458 = vadd.f32 %v286, %v403
        %v459 = vadd.f32 %v287, %v408
        %v460 = vadd.f32 %v288, %v413
        %v461 = vadd.f32 %v289, %v418
        %v462 = vadd.f32 %v290, %v423
        %v463 = vadd.f32 %v291, %v428
        %v464 = vadd.f32 %v292, %v433
        %v465 = vadd.f32 %v293, %v438
        %v466 = vadd.f32 %v294, %v443
        %v467 = vadd.f32 %v295, %v448
        %v468 = vadd.f32 %v296, %v453
        %469 = vst [vmem:[#allocation2] sm:$0xff] %v456
        %470 = vst [vmem:[#allocation2 + $0x8] sm:$0xff] %v457
        %471 = vst [vmem:[#allocation2 + $0x10] sm:$0xff] %v458
        %472 = vst [vmem:[#allocation2 + $0x18] sm:$0xff] %v459
        %473 = vst [vmem:[#allocation2 + $0x20] sm:$0xff] %v460
        %474 = vst [vmem:[#allocation2 + $0x28] sm:$0xff] %v461
        %475 = vst [vmem:[#allocation2 + $0x30] sm:$0xff] %v462
        %476 = vst [vmem:[#allocation2 + $0x38] sm:$0xff] %v463
        %477 = vst [vmem:[#allocation2 + $0x40] sm:$0xff] %v464
        %478 = vst [vmem:[#allocation2 + $0x48] sm:$0xff] %v465
        %479 = vst [vmem:[#allocation2 + $0x50] sm:$0xff] %v466
        %480 = vst [vmem:[#allocation2 + $0x58] sm:$0xff] %v467
        %481 = vst [vmem:[#allocation2 + $0x60] sm:$0xff] %v468
        %p482 = scmp.eq.s32.totalorder %s18, 1
        // Predicated region
        $region71: #{lorentz_graph_convolution.3} parent=61 // pred_check
          %p483 = pneg %p482
        $region72: #{lorentz_graph_convolution.3} parent=61 // pred_check_branch
          %485 = sbr.rel (%p483) target = $region74
        $region73: #{lorentz_graph_convolution.3} parent=61 // pred_region
          %v486 = vld [vmem:[#allocation2] sm:$0xff]
          %v487 = vld [vmem:[#allocation2 + $0x8] sm:$0xff]
          %v488 = vld [vmem:[#allocation2 + $0x10] sm:$0xff]
          %v489 = vld [vmem:[#allocation2 + $0x18] sm:$0xff]
          %v490 = vld [vmem:[#allocation2 + $0x20] sm:$0xff]
          %v491 = vld [vmem:[#allocation2 + $0x28] sm:$0xff]
          %v492 = vld [vmem:[#allocation2 + $0x30] sm:$0xff]
          %v493 = vld [vmem:[#allocation2 + $0x38] sm:$0xff]
          %v494 = vld [vmem:[#allocation2 + $0x40] sm:$0xff]
          %v495 = vld [vmem:[#allocation2 + $0x48] sm:$0xff]
          %v496 = vld [vmem:[#allocation2 + $0x50] sm:$0xff]
          %v497 = vld [vmem:[#allocation2 + $0x58] sm:$0xff]
          %v498 = vld [vmem:[#allocation2 + $0x60] sm:$0xff]
          %v499 = vmul.f32 %v486, %v486
          %v500 = vmul.f32 %v487, %v487
          %v501 = vmul.f32 %v488, %v488
          %v502 = vmul.f32 %v489, %v489
          %v503 = vmul.f32 %v490, %v490
          %v504 = vmul.f32 %v491, %v491
          %v505 = vmul.f32 %v492, %v492
          %v506 = vmul.f32 %v493, %v493
          %v507 = vmul.f32 %v494, %v494
          %v508 = vmul.f32 %v495, %v495
          %v509 = vmul.f32 %v496, %v496
          %v510 = vmul.f32 %v497, %v497
          %v511 = vmul.f32 %v498, %v498
          %512 = vadd.xlane.f32.xlu0 %v499
          %v513 = vpop.xlane.xlu0 %512
          %514 = vadd.xlane.f32.xlu0 %v500
          %v515 = vpop.xlane.xlu0 %514
          %516 = vadd.xlane.f32.xlu0 %v501
          %v517 = vpop.xlane.xlu0 %516
          %518 = vadd.xlane.f32.xlu0 %v502
          %v519 = vpop.xlane.xlu0 %518
          %520 = vadd.xlane.f32.xlu0 %v503
          %v521 = vpop.xlane.xlu0 %520
          %522 = vadd.xlane.f32.xlu0 %v504
          %v523 = vpop.xlane.xlu0 %522
          %524 = vadd.xlane.f32.xlu0 %v505
          %v525 = vpop.xlane.xlu0 %524
          %526 = vadd.xlane.f32.xlu0 %v506
          %v527 = vpop.xlane.xlu0 %526
          %528 = vadd.xlane.f32.xlu0 %v507
          %v529 = vpop.xlane.xlu0 %528
          %530 = vadd.xlane.f32.xlu0 %v508
          %v531 = vpop.xlane.xlu0 %530
          %532 = vadd.xlane.f32.xlu0 %v509
          %v533 = vpop.xlane.xlu0 %532
          %534 = vadd.xlane.f32.xlu0 %v510
          %v535 = vpop.xlane.xlu0 %534
          %536 = vadd.xlane.f32.xlu0 %v511
          %v537 = vpop.xlane.xlu0 %536
          %v538 = vmul.f32 %v486, 2.0
          %v539 = vmul.f32 %v487, 2.0
          %v540 = vmul.f32 %v488, 2.0
          %v541 = vmul.f32 %v489, 2.0
          %v542 = vmul.f32 %v490, 2.0
          %v543 = vmul.f32 %v491, 2.0
          %v544 = vmul.f32 %v492, 2.0
          %v545 = vmul.f32 %v493, 2.0
          %v546 = vmul.f32 %v494, 2.0
          %v547 = vmul.f32 %v495, 2.0
          %v548 = vmul.f32 %v496, 2.0
          %v549 = vmul.f32 %v497, 2.0
          %v550 = vmul.f32 %v498, 2.0
          %v551 = vmul.f32 %v538, %v486
          %v552 = vmul.f32 %v539, %v487
          %v553 = vmul.f32 %v540, %v488
          %v554 = vmul.f32 %v541, %v489
          %v555 = vmul.f32 %v542, %v490
          %v556 = vmul.f32 %v543, %v491
          %v557 = vmul.f32 %v544, %v492
          %v558 = vmul.f32 %v545, %v493
          %v559 = vmul.f32 %v546, %v494
          %v560 = vmul.f32 %v547, %v495
          %v561 = vmul.f32 %v548, %v496
          %v562 = vmul.f32 %v549, %v497
          %v563 = vmul.f32 %v550, %v498
          %v564 = vsub.f32 %v551, %v513
          %v565 = vsub.f32 %v552, %v515
          %v566 = vsub.f32 %v553, %v517
          %v567 = vsub.f32 %v554, %v519
          %v568 = vsub.f32 %v555, %v521
          %v569 = vsub.f32 %v556, %v523
          %v570 = vsub.f32 %v557, %v525
          %v571 = vsub.f32 %v558, %v527
          %v572 = vsub.f32 %v559, %v529
          %v573 = vsub.f32 %v560, %v531
          %v574 = vsub.f32 %v561, %v533
          %v575 = vsub.f32 %v562, %v535
          %v576 = vsub.f32 %v563, %v537
          %v577 = vand.u32 2147483647, %v564
          %v578 = vand.u32 2147483647, %v565
          %v579 = vand.u32 2147483647, %v566
          %v580 = vand.u32 2147483647, %v567
          %v581 = vand.u32 2147483647, %v568
          %v582 = vand.u32 2147483647, %v569
          %v583 = vand.u32 2147483647, %v570
          %v584 = vand.u32 2147483647, %v571
          %v585 = vand.u32 2147483647, %v572
          %v586 = vand.u32 2147483647, %v573
          %v587 = vand.u32 2147483647, %v574
          %v588 = vand.u32 2147483647, %v575
          %v589 = vand.u32 2147483647, %v576
          %v590 = vmax.f32 %v577, 1e-08
          %v591 = vmax.f32 %v578, 1e-08
          %v592 = vmax.f32 %v579, 1e-08
          %v593 = vmax.f32 %v580, 1e-08
          %v594 = vmax.f32 %v581, 1e-08
          %v595 = vmax.f32 %v582, 1e-08
          %v596 = vmax.f32 %v583, 1e-08
          %v597 = vmax.f32 %v584, 1e-08
          %v598 = vmax.f32 %v585, 1e-08
          %v599 = vmax.f32 %v586, 1e-08
          %v600 = vmax.f32 %v587, 1e-08
          %v601 = vmax.f32 %v588, 1e-08
          %v602 = vmax.f32 %v589, 1e-08
          %v603 = vrsqrt.pop %v590
          %v604 = vrsqrt.pop %v591
          %v605 = vrsqrt.pop %v592
          %v606 = vrsqrt.pop %v593
          %v607 = vrsqrt.pop %v594
          %v608 = vrsqrt.pop %v595
          %v609 = vrsqrt.pop %v596
          %v610 = vrsqrt.pop %v597
          %v611 = vrsqrt.pop %v598
          %v612 = vrsqrt.pop %v599
          %v613 = vrsqrt.pop %v600
          %v614 = vrsqrt.pop %v601
          %v615 = vrsqrt.pop %v602
          %617 = vset.pattern.permute.xlu0 0
          %618 = vperm.xlu0 %617, %v603
          %v619 = vpop.permute.xlu0 %618
          %622 = vset.pattern.permute.xlu0 0
          %623 = vperm.xlu0 %622, %v604
          %v624 = vpop.permute.xlu0 %623
          %627 = vset.pattern.permute.xlu0 0
          %628 = vperm.xlu0 %627, %v605
          %v629 = vpop.permute.xlu0 %628
          %632 = vset.pattern.permute.xlu0 0
          %633 = vperm.xlu0 %632, %v606
          %v634 = vpop.permute.xlu0 %633
          %637 = vset.pattern.permute.xlu0 0
          %638 = vperm.xlu0 %637, %v607
          %v639 = vpop.permute.xlu0 %638
          %642 = vset.pattern.permute.xlu0 0
          %643 = vperm.xlu0 %642, %v608
          %v644 = vpop.permute.xlu0 %643
          %647 = vset.pattern.permute.xlu0 0
          %648 = vperm.xlu0 %647, %v609
          %v649 = vpop.permute.xlu0 %648
          %652 = vset.pattern.permute.xlu0 0
          %653 = vperm.xlu0 %652, %v610
          %v654 = vpop.permute.xlu0 %653
          %657 = vset.pattern.permute.xlu0 0
          %658 = vperm.xlu0 %657, %v611
          %v659 = vpop.permute.xlu0 %658
          %662 = vset.pattern.permute.xlu0 0
          %663 = vperm.xlu0 %662, %v612
          %v664 = vpop.permute.xlu0 %663
          %667 = vset.pattern.permute.xlu0 0
          %668 = vperm.xlu0 %667, %v613
          %v669 = vpop.permute.xlu0 %668
          %672 = vset.pattern.permute.xlu0 0
          %673 = vperm.xlu0 %672, %v614
          %v674 = vpop.permute.xlu0 %673
          %677 = vset.pattern.permute.xlu0 0
          %678 = vperm.xlu0 %677, %v615
          %v679 = vpop.permute.xlu0 %678
          %v681 = vmul.f32 %v486, %v619
          %v682 = vmul.f32 %v487, %v624
          %v683 = vmul.f32 %v488, %v629
          %v684 = vmul.f32 %v489, %v634
          %v685 = vmul.f32 %v490, %v639
          %v686 = vmul.f32 %v491, %v644
          %v687 = vmul.f32 %v492, %v649
          %v688 = vmul.f32 %v493, %v654
          %v689 = vmul.f32 %v494, %v659
          %v690 = vmul.f32 %v495, %v664
          %v691 = vmul.f32 %v496, %v669
          %v692 = vmul.f32 %v497, %v674
          %v693 = vmul.f32 %v498, %v679
          %694 = vst [vmem:[%s265] sm:$0xff] %v681
          %695 = vst [vmem:[%s265 + $0x8] sm:$0xff] %v682
          %696 = vst [vmem:[%s265 + $0x10] sm:$0xff] %v683
          %697 = vst [vmem:[%s265 + $0x18] sm:$0xff] %v684
          %698 = vst [vmem:[%s265 + $0x20] sm:$0xff] %v685
          %699 = vst [vmem:[%s265 + $0x28] sm:$0xff] %v686
          %700 = vst [vmem:[%s265 + $0x30] sm:$0xff] %v687
          %701 = vst [vmem:[%s265 + $0x38] sm:$0xff] %v688
          %702 = vst [vmem:[%s265 + $0x40] sm:$0xff] %v689
          %703 = vst [vmem:[%s265 + $0x48] sm:$0xff] %v690
          %704 = vst [vmem:[%s265 + $0x50] sm:$0xff] %v691
          %705 = vst [vmem:[%s265 + $0x58] sm:$0xff] %v692
          %706 = vst [vmem:[%s265 + $0x60] sm:$0xff] %v693
        $region74: #{lorentz_graph_convolution.3} parent=61 // pred_fallthru
          _
        %s707 = smul.u32 13, %s17
        %p708 = scmp.lt.s32.totalorder %s707, 25
        %s709 = scalar_select %p708, %s707, 25
        %s710 = smul.addr %s709, 8
        %s711 = scalar_lea.vmem %s2, %s710
        // Predicated region
        $region75: #{lorentz_graph_convolution.3} parent=61 // pred_check
          %p712 = pneg %p97
        $region76: #{lorentz_graph_convolution.3} parent=61 // pred_check_branch
          %714 = sbr.rel (%p712) target = $region78
        $region77: #{lorentz_graph_convolution.3} parent=61 // pred_region
          %s715 = smul.u32 13, %s17
        $region78: #{lorentz_graph_convolution.3} parent=61 // pred_fallthru
          _
      $region62: #{lorentz_graph_convolution.3} parent=5 // pred_fallthru
        _
      %p716 = scmp.le.s32.totalorder 2, %s8
      // Predicated region
      $region79: #{lorentz_graph_convolution.3} parent=5 // pred_check
        %p717 = pneg %p716
      $region80: #{lorentz_graph_convolution.3} parent=5 // pred_check_branch
        %719 = sbr.rel (%p717) target = $region82
      $region81: #{lorentz_graph_convolution.3} parent=5 // pred_region
        %s720 = ssub.s32 %s8, 2
        // Predicated region
        $region83: #{lorentz_graph_convolution.3} parent=81 // pred_check
          %p721 = pneg %p103
        $region84: #{lorentz_graph_convolution.3} parent=81 // pred_check_branch
          %723 = sbr.rel (%p721) target = $region86
        $region85: #{lorentz_graph_convolution.3} parent=81 // pred_region
          %s724 = smul.u32 13, %s19
          %p725 = scmp.lt.s32.totalorder %s724, 25
          %s726 = scalar_select %p725, %s724, 25
          %s727 = smul.addr %s726, 8
          %s728 = scalar_lea.vmem %s2, %s727
        $region86: #{lorentz_graph_convolution.3} parent=81 // pred_fallthru
          _
      $region82: #{lorentz_graph_convolution.3} parent=5 // pred_fallthru
        _
    $region6: #{lorentz_graph_convolution.3} parent=1 // loop_footer
      %s12 = sadd.s32 1, %s8
    $region7: #{lorentz_graph_convolution.3} parent=1 // loop_footer_branch
      %7 = sbr.rel target = $region3
    $region8: #{lorentz_graph_convolution.3} parent=1 // loop_exit
      _

// kernel: lorentz_graph_convolution.2
$region0: #{lorentz_graph_convolution.2}
  #allocation0 [shape = 'u32[]', space=smem, size = 0x4, offset = 0x4, fixed_abs, tag = 'smem constant byte address 0x4 - core index']
  #allocation1 [shape = 'u32[144,128]{1,0:T(1,128)}', space=vmem, size = 0x12000, scoped, tag = 'internal scratch']
  #allocation2 [shape = 'f32[1,1]{1,0:T(1,128)S(6)}', space=smem, size = 0x200, scoped, tag = 'scoped memory for lorentz_graph_convolution.2']
  %s0 = inlined_call_operand.<no memory space> [shape: f32[1,1], index: 0, kind: input, shape index: {}]
  %s1 = inlined_call_operand.vmem [shape: f32[256,32], index: 1, kind: input, shape index: {}]
  %s2 = inlined_call_operand.vmem [shape: f32[32,128], index: 2, kind: input, shape index: {}]
  %s3 = inlined_call_operand.vmem [shape: f32[1,128], index: 3, kind: input, shape index: {}]
  %s4 = inlined_call_operand.vmem [shape: f32[256,128], index: 4, kind: output, shape index: {}]
  %s5 = sld [smem:[#allocation0]]
  $region49: #{lorentz_graph_convolution.2} parent=0
    _
  %s7 = ssub.s32 1, %s5
  %s8 = scalar_select 0, %s7, %s5
  %9 = sst [smem:[#allocation2]] %s0
  loop: start=0, step=1, limit=4
  $region2: #{lorentz_graph_convolution.2} parent=0 // loop_pre_header
    _
  $region3: #{lorentz_graph_convolution.2} parent=0 // loop_header
    %s11 = sphi 0, %s15
    %p12 = scmp.ge.s32.totalorder %s11, 4
    %s19 = sphi 0, %s19
    %s21 = sphi 0, %s19
    %s22 = sphi 0, %s21
    %s36 = sphi 0, %s22
    %s42 = sphi 0, %s44
    %s45 = sphi 0, %s42
    %s46 = sphi 0, %s45
    %s62 = sphi 0, %s46
    %s66 = sphi 0, %s66
    %s68 = sphi 0, %s66
    %s69 = sphi 0, %s68
    %s83 = sphi 0, %s69
    %s87 = sphi 0, %s87
    %s89 = sphi 0, %s87
    %s90 = sphi 0, %s89
    %s104 = sphi 0, %s90
    %s110 = sphi 0, %s112
    %s113 = sphi 0, %s110
    %s114 = sphi 0, %s113
    %s130 = sphi 0, %s114
  $region4: #{lorentz_graph_convolution.2} parent=0 // loop_header_branch
    %14 = sbr.rel (%p12) target = $region8
  $region5: #{lorentz_graph_convolution.2} parent=0 // loop_body
    %s16 = ssub.s32 %s11, 1
    %s17 = ssub.s32 %s11, 2
    %s18 = sadd.s32 %s11, 1
    %s20 = sadd.s32 %s19, 1
    %p23 = scmp.eq.s32.totalorder %s11, 1
    %p24 = scmp.ne.s32.totalorder %s19, %s21
    %p25 = scmp.eq.s32.totalorder %s11, 0
    %p26 = por %p24, %p25
    %p27 = scmp.ne.s32.totalorder %s19, %s21
    %p28 = scmp.eq.s32.totalorder %s16, 1
    %p29 = por %p27, %p28
    %p30 = scmp.ne.s32.totalorder %s21, %s22
    %p31 = scmp.eq.s32.totalorder %s16, 0
    %p32 = por %p30, %p31
    %p33 = scmp.ne.s32.totalorder %s21, %s22
    %p34 = scmp.eq.s32.totalorder %s17, 1
    %p35 = por %p33, %p34
    %p37 = scmp.ne.s32.totalorder %s22, %s36
    %p38 = scmp.eq.s32.totalorder %s17, 0
    %p39 = por %p37, %p38
    %s40 = ssub.s32 %s11, %s18
    %p41 = scmp.eq.s32.totalorder %s40, 0
    %s43 = sadd.s32 %s42, 1
    %s44 = scalar_select %p41, %s42, %s43
    %p47 = pneg %p41
    %p48 = scmp.eq.s32.totalorder %s11, 1
    %p49 = por %p47, %p48
    %p50 = scmp.ne.s32.totalorder %s42, %s45
    %p51 = scmp.eq.s32.totalorder %s11, 0
    %p52 = por %p50, %p51
    %p53 = scmp.ne.s32.totalorder %s42, %s45
    %p54 = scmp.eq.s32.totalorder %s16, 1
    %p55 = por %p53, %p54
    %p56 = scmp.ne.s32.totalorder %s45, %s46
    %p57 = scmp.eq.s32.totalorder %s16, 0
    %p58 = por %p56, %p57
    %p59 = scmp.ne.s32.totalorder %s45, %s46
    %p60 = scmp.eq.s32.totalorder %s17, 1
    %p61 = por %p59, %p60
    %p63 = scmp.ne.s32.totalorder %s46, %s62
    %p64 = scmp.eq.s32.totalorder %s17, 0
    %p65 = por %p63, %p64
    %s67 = sadd.s32 %s66, 1
    %p70 = scmp.eq.s32.totalorder %s11, 1
    %p71 = scmp.ne.s32.totalorder %s66, %s68
    %p72 = scmp.eq.s32.totalorder %s11, 0
    %p73 = por %p71, %p72
    %p74 = scmp.ne.s32.totalorder %s66, %s68
    %p75 = scmp.eq.s32.totalorder %s16, 1
    %p76 = por %p74, %p75
    %p77 = scmp.ne.s32.totalorder %s68, %s69
    %p78 = scmp.eq.s32.totalorder %s16, 0
    %p79 = por %p77, %p78
    %p80 = scmp.ne.s32.totalorder %s68, %s69
    %p81 = scmp.eq.s32.totalorder %s17, 1
    %p82 = por %p80, %p81
    %p84 = scmp.ne.s32.totalorder %s69, %s83
    %p85 = scmp.eq.s32.totalorder %s17, 0
    %p86 = por %p84, %p85
    %s88 = sadd.s32 %s87, 1
    %p91 = scmp.eq.s32.totalorder %s11, 1
    %p92 = scmp.ne.s32.totalorder %s87, %s89
    %p93 = scmp.eq.s32.totalorder %s11, 0
    %p94 = por %p92, %p93
    %p95 = scmp.ne.s32.totalorder %s87, %s89
    %p96 = scmp.eq.s32.totalorder %s16, 1
    %p97 = por %p95, %p96
    %p98 = scmp.ne.s32.totalorder %s89, %s90
    %p99 = scmp.eq.s32.totalorder %s16, 0
    %p100 = por %p98, %p99
    %p101 = scmp.ne.s32.totalorder %s89, %s90
    %p102 = scmp.eq.s32.totalorder %s17, 1
    %p103 = por %p101, %p102
    %p105 = scmp.ne.s32.totalorder %s90, %s104
    %p106 = scmp.eq.s32.totalorder %s17, 0
    %p107 = por %p105, %p106
    %s108 = ssub.s32 %s11, %s18
    %p109 = scmp.eq.s32.totalorder %s108, 0
    %s111 = sadd.s32 %s110, 1
    %s112 = scalar_select %p109, %s110, %s111
    %p115 = pneg %p109
    %p116 = scmp.eq.s32.totalorder %s11, 1
    %p117 = por %p115, %p116
    %p118 = scmp.ne.s32.totalorder %s110, %s113
    %p119 = scmp.eq.s32.totalorder %s11, 0
    %p120 = por %p118, %p119
    %p121 = scmp.ne.s32.totalorder %s110, %s113
    %p122 = scmp.eq.s32.totalorder %s16, 1
    %p123 = por %p121, %p122
    %p124 = scmp.ne.s32.totalorder %s113, %s114
    %p125 = scmp.eq.s32.totalorder %s16, 0
    %p126 = por %p124, %p125
    %p127 = scmp.ne.s32.totalorder %s113, %s114
    %p128 = scmp.eq.s32.totalorder %s17, 1
    %p129 = por %p127, %p128
    %p131 = scmp.ne.s32.totalorder %s114, %s130
    %p132 = scmp.eq.s32.totalorder %s17, 0
    %p133 = por %p131, %p132
    %p134 = scmp.le.s32.totalorder 1, %s11
    %p135 = scmp.lt.s32.totalorder %s11, 3
    %p136 = pnand %p134, %p135
    %p137 = pneg %p136
    // Predicated region
    $region9: #{lorentz_graph_convolution.2} parent=5 // pred_check
      _
    $region10: #{lorentz_graph_convolution.2} parent=5 // pred_check_branch
      %139 = sbr.rel (%p136) target = $region12
    $region11: #{lorentz_graph_convolution.2} parent=5 // pred_region
      %s140 = ssub.s32 %s11, 1
      // Predicated region
      $region13: #{lorentz_graph_convolution.2} parent=11 // pred_check
        %p141 = pneg %p32
      $region14: #{lorentz_graph_convolution.2} parent=11 // pred_check_branch
        %143 = sbr.rel (%p141) target = $region16
      $region15: #{lorentz_graph_convolution.2} parent=11 // pred_region
        _
      $region16: #{lorentz_graph_convolution.2} parent=11 // pred_fallthru
        _
      // Predicated region
      $region17: #{lorentz_graph_convolution.2} parent=11 // pred_check
        %p144 = pneg %p79
      $region18: #{lorentz_graph_convolution.2} parent=11 // pred_check_branch
        %146 = sbr.rel (%p144) target = $region20
      $region19: #{lorentz_graph_convolution.2} parent=11 // pred_region
        _
      $region20: #{lorentz_graph_convolution.2} parent=11 // pred_fallthru
        _
      // Predicated region
      $region21: #{lorentz_graph_convolution.2} parent=11 // pred_check
        %p147 = pneg %p100
      $region22: #{lorentz_graph_convolution.2} parent=11 // pred_check_branch
        %149 = sbr.rel (%p147) target = $region24
      $region23: #{lorentz_graph_convolution.2} parent=11 // pred_region
        _
      $region24: #{lorentz_graph_convolution.2} parent=11 // pred_fallthru
        _
    $region12: #{lorentz_graph_convolution.2} parent=5 // pred_fallthru
      _
    %p150 = scmp.lt.s32.totalorder %s11, 2
    // Predicated region
    $region25: #{lorentz_graph_convolution.2} parent=5 // pred_check
      %p151 = pneg %p150
    $region26: #{lorentz_graph_convolution.2} parent=5 // pred_check_branch
      %153 = sbr.rel (%p151) target = $region28
    $region27: #{lorentz_graph_convolution.2} parent=5 // pred_region
      // Predicated region
      $region29: #{lorentz_graph_convolution.2} parent=27 // pred_check
        %p154 = pneg %p52
      $region30: #{lorentz_graph_convolution.2} parent=27 // pred_check_branch
        %156 = sbr.rel (%p154) target = $region32
      $region31: #{lorentz_graph_convolution.2} parent=27 // pred_region
        %s157 = smul.u32 16, %s11
        %p158 = scmp.lt.s32.totalorder %s157, 31
        %s159 = scalar_select %p158, %s157, 31
        %s160 = smul.addr %s159, 8
        %s161 = scalar_lea.vmem %s1, %s160
        %s162 = smul.u32 16, %s11
      $region32: #{lorentz_graph_convolution.2} parent=27 // pred_fallthru
        _
    $region28: #{lorentz_graph_convolution.2} parent=5 // pred_fallthru
      _
    %p163 = scmp.le.s32.totalorder 1, %s11
    %p164 = scmp.lt.s32.totalorder %s11, 3
    %p165 = pnand %p163, %p164
    %p166 = pneg %p165
    // Predicated region
    $region33: #{lorentz_graph_convolution.2} parent=5 // pred_check
      _
    $region34: #{lorentz_graph_convolution.2} parent=5 // pred_check_branch
      %168 = sbr.rel (%p165) target = $region36
    $region35: #{lorentz_graph_convolution.2} parent=5 // pred_region
      %s169 = ssub.s32 %s11, 1
      %p170 = pneg %p32
      %p171 = pneg %p29
      %s172 = smul.u32 16, %s16
      %p173 = scmp.lt.s32.totalorder %s172, 31
      %s174 = scalar_select %p173, %s172, 31
      %s175 = smul.addr %s174, 8
      %s176 = scalar_lea.vmem %s1, %s175
      %p177 = pneg %p58
      %p178 = pneg %p55
      %p179 = pneg %p79
      %p180 = pneg %p76
      %p181 = pneg %p100
      %p182 = pneg %p97
      %p183 = pneg %p126
      %p184 = pneg %p123
      %s185 = smul.u32 16, %s16
      %p186 = scmp.lt.s32.totalorder %s185, 31
      %s187 = scalar_select %p186, %s185, 31
      %s188 = smul.addr %s187, 8
      %s189 = scalar_lea.vmem %s4, %s188
      %s190 = smul.u32 16, %s16
      %p191 = scmp.lt.s32.totalorder %s190, 31
      %s192 = scalar_select %p191, %s190, 31
      %s193 = smul.addr %s192, 8
      %s194 = scalar_lea.vmem %s1, %s193
      %s195 = smul.u32 16, %s16
      %s196 = smul.u32 16, %s16
      %p197 = scmp.lt.s32.totalorder %s196, 31
      %s198 = scalar_select %p197, %s196, 31
      %s199 = smul.addr %s198, 8
      %s200 = scalar_lea.vmem %s4, %s199
      %s201 = smul.u32 16, %s16
      %v202 = vld [vmem:[%s194] sm:$0xff]
      %v203 = vld [vmem:[%s194 + $0x8] sm:$0xff]
      %v204 = vld [vmem:[%s194 + $0x10] sm:$0xff]
      %v205 = vld [vmem:[%s194 + $0x18] sm:$0xff]
      %v206 = vld [vmem:[%s194 + $0x20] sm:$0xff]
      %v207 = vld [vmem:[%s194 + $0x28] sm:$0xff]
      %v208 = vld [vmem:[%s194 + $0x30] sm:$0xff]
      %v209 = vld [vmem:[%s194 + $0x38] sm:$0xff]
      %v210 = vld [vmem:[%s194 + $0x40] sm:$0xff]
      %v211 = vld [vmem:[%s194 + $0x48] sm:$0xff]
      %v212 = vld [vmem:[%s194 + $0x50] sm:$0xff]
      %v213 = vld [vmem:[%s194 + $0x58] sm:$0xff]
      %v214 = vld [vmem:[%s194 + $0x60] sm:$0xff]
      %v215 = vld [vmem:[%s194 + $0x68] sm:$0xff]
      %v216 = vld [vmem:[%s194 + $0x70] sm:$0xff]
      %v217 = vld [vmem:[%s194 + $0x78] sm:$0xff]
      %v218 = vld [vmem:[%s2] sm:$0xff]
      %v219 = vld [vmem:[%s2 + $0x8] sm:$0xff]
      %v220 = vld [vmem:[%s2 + $0x10] sm:$0xff]
      %v221 = vld [vmem:[%s2 + $0x18] sm:$0xff]
      %v222 = vld [vmem:[%s3] sm:$0x1]
      %v224 = vlaneseq
      %v225 = vshrl.u32 %v224, 7
      %v226 = vsub.s32 0, %v225
      %v227 = vrot.slane %v222, %v226
      %vm229 = vcmask 261120
      %v231 = vsel %vm229, %v202, 0
      %v234 = vsel %vm229, %v203, 0
      %v237 = vsel %vm229, %v204, 0
      %v240 = vsel %vm229, %v205, 0
      %v243 = vsel %vm229, %v206, 0
      %v246 = vsel %vm229, %v207, 0
      %v249 = vsel %vm229, %v208, 0
      %v252 = vsel %vm229, %v209, 0
      %v255 = vsel %vm229, %v210, 0
      %v258 = vsel %vm229, %v211, 0
      %v261 = vsel %vm229, %v212, 0
      %v264 = vsel %vm229, %v213, 0
      %v267 = vsel %vm229, %v214, 0
      %v270 = vsel %vm229, %v215, 0
      %v273 = vsel %vm229, %v216, 0
      %v276 = vsel %vm229, %v217, 0
      %278 = vmatprep.subr.mxu0 0.0
      %279 = vmatpush1.msra.mxu0 %v218
      %280 = vmatprep.subr.mxu0 0.0
      %281 = vmatpush1.msra.mxu0 %v219
      %282 = vmatprep.subr.mxu0 0.0
      %283 = vmatpush1.msra.mxu0 %v220
      %284 = vmatprep.subr.mxu0 0.0
      %285 = vmatpush1.msra.mxu0 %v221
      %286 = vmatprep.subr.mxu0 0.0
      %287 = vmatpush1.msra.mxu0 0.0
      %288 = vmatprep.subr.mxu0 0.0
      %289 = vmatpush1.msra.mxu0 0.0
      %290 = vmatprep.subr.mxu0 0.0
      %291 = vmatpush1.msra.mxu0 0.0
      %292 = vmatprep.subr.mxu0 0.0
      %293 = vmatpush1.msra.mxu0 0.0
      %294 = vmatprep.subr.mxu0 0.0
      %295 = vmatpush1.msra.mxu0 0.0
      %296 = vmatprep.subr.mxu0 0.0
      %297 = vmatpush1.msra.mxu0 0.0
      %298 = vmatprep.subr.mxu0 0.0
      %299 = vmatpush1.msra.mxu0 0.0
      %300 = vmatprep.subr.mxu0 0.0
      %301 = vmatpush1.msra.mxu0 0.0
      %302 = vmatprep.subr.mxu0 0.0
      %303 = vmatpush1.msra.mxu0 0.0
      %304 = vmatprep.subr.mxu0 0.0
      %305 = vmatpush1.msra.mxu0 0.0
      %306 = vmatprep.subr.mxu0 0.0
      %307 = vmatpush1.msra.mxu0 0.0
      %308 = vmatprep.subr.mxu0 0.0
      %309 = vmatpush1.msra.mxu0 0.0
      %310 = vmatprep.subr.mxu0 0.0
      %311 = vmatpush1.msra.mxu0 0.0
      %312 = vmatprep.subr.mxu0 0.0
      %313 = vmatpush1.msra.mxu0 0.0
      %314 = vmatprep.subr.mxu0 0.0
      %315 = vmatpush1.msra.mxu0 0.0
      %316 = vmatprep.subr.mxu0 0.0
      %317 = vmatpush1.msra.mxu0 0.0
      %318 = vmatprep.subr.mxu0 0.0
      %319 = vmatpush1.msra.mxu0 0.0
      %320 = vmatprep.subr.mxu0 0.0
      %321 = vmatpush1.msra.mxu0 0.0
      %322 = vmatprep.subr.mxu0 0.0
      %323 = vmatpush1.msra.mxu0 0.0
      %324 = vmatprep.subr.mxu0 0.0
      %325 = vmatpush1.msra.mxu0 0.0
      %326 = vmatprep.subr.mxu0 0.0
      %327 = vmatpush1.msra.mxu0 0.0
      %328 = vmatprep.subr.mxu0 0.0
      %329 = vmatpush1.msra.mxu0 0.0
      %330 = vmatprep.subr.mxu0 0.0
      %331 = vmatpush1.msra.mxu0 0.0
      %332 = vmatprep.subr.mxu0 0.0
      %333 = vmatpush1.msra.mxu0 0.0
      %334 = vmatprep.subr.mxu0 0.0
      %335 = vmatpush1.msra.mxu0 0.0
      %336 = vmatprep.subr.mxu0 0.0
      %337 = vmatpush1.msra.mxu0 0.0
      %338 = vmatprep.subr.mxu0 0.0
      %339 = vmatpush1.msra.mxu0 0.0
      %340 = vmatprep.subr.mxu0 0.0
      %341 = vmatpush1.msra.mxu0 0.0
      %342 = vmatprep.mubr.f32.mxu0 0.0
      %343 = vmatmul.mubr.f32.gmra.mrb[0].mxu0 %v231
      %v344 = vpop.f32.mrb[0].mxu0
      %v345 = vadd.f32 %v227, %v344
      %v346 = vpop.f32.mrb[0].mxu0
      %347 = vmatprep.mubr.f32.mxu0 0.0
      %348 = vmatmul.mubr.f32.gmra.mrb[0].mxu0 %v234
      %v349 = vpop.f32.mrb[0].mxu0
      %v350 = vadd.f32 %v227, %v349
      %v351 = vpop.f32.mrb[0].mxu0
      %352 = vmatprep.mubr.f32.mxu0 0.0
      %353 = vmatmul.mubr.f32.gmra.mrb[0].mxu0 %v237
      %v354 = vpop.f32.mrb[0].mxu0
      %v355 = vadd.f32 %v227, %v354
      %v356 = vpop.f32.mrb[0].mxu0
      %357 = vmatprep.mubr.f32.mxu0 0.0
      %358 = vmatmul.mubr.f32.gmra.mrb[0].mxu0 %v240
      %v359 = vpop.f32.mrb[0].mxu0
      %v360 = vadd.f32 %v227, %v359
      %v361 = vpop.f32.mrb[0].mxu0
      %362 = vmatprep.mubr.f32.mxu0 0.0
      %363 = vmatmul.mubr.f32.gmra.mrb[0].mxu0 %v243
      %v364 = vpop.f32.mrb[0].mxu0
      %v365 = vadd.f32 %v227, %v364
      %v366 = vpop.f32.mrb[0].mxu0
      %367 = vmatprep.mubr.f32.mxu0 0.0
      %368 = vmatmul.mubr.f32.gmra.mrb[0].mxu0 %v246
      %v369 = vpop.f32.mrb[0].mxu0
      %v370 = vadd.f32 %v227, %v369
      %v371 = vpop.f32.mrb[0].mxu0
      %372 = vmatprep.mubr.f32.mxu0 0.0
      %373 = vmatmul.mubr.f32.gmra.mrb[0].mxu0 %v249
      %v374 = vpop.f32.mrb[0].mxu0
      %v375 = vadd.f32 %v227, %v374
      %v376 = vpop.f32.mrb[0].mxu0
      %377 = vmatprep.mubr.f32.mxu0 0.0
      %378 = vmatmul.mubr.f32.gmra.mrb[0].mxu0 %v252
      %v379 = vpop.f32.mrb[0].mxu0
      %v380 = vadd.f32 %v227, %v379
      %v381 = vpop.f32.mrb[0].mxu0
      %382 = vmatprep.mubr.f32.mxu0 0.0
      %383 = vmatmul.mubr.f32.gmra.mrb[0].mxu0 %v255
      %v384 = vpop.f32.mrb[0].mxu0
      %v385 = vadd.f32 %v227, %v384
      %v386 = vpop.f32.mrb[0].mxu0
      %387 = vmatprep.mubr.f32.mxu0 0.0
      %388 = vmatmul.mubr.f32.gmra.mrb[0].mxu0 %v258
      %v389 = vpop.f32.mrb[0].mxu0
      %v390 = vadd.f32 %v227, %v389
      %v391 = vpop.f32.mrb[0].mxu0
      %392 = vmatprep.mubr.f32.mxu0 0.0
      %393 = vmatmul.mubr.f32.gmra.mrb[0].mxu0 %v261
      %v394 = vpop.f32.mrb[0].mxu0
      %v395 = vadd.f32 %v227, %v394
      %v396 = vpop.f32.mrb[0].mxu0
      %397 = vmatprep.mubr.f32.mxu0 0.0
      %398 = vmatmul.mubr.f32.gmra.mrb[0].mxu0 %v264
      %v399 = vpop.f32.mrb[0].mxu0
      %v400 = vadd.f32 %v227, %v399
      %v401 = vpop.f32.mrb[0].mxu0
      %402 = vmatprep.mubr.f32.mxu0 0.0
      %403 = vmatmul.mubr.f32.gmra.mrb[0].mxu0 %v267
      %v404 = vpop.f32.mrb[0].mxu0
      %v405 = vadd.f32 %v227, %v404
      %v406 = vpop.f32.mrb[0].mxu0
      %407 = vmatprep.mubr.f32.mxu0 0.0
      %408 = vmatmul.mubr.f32.gmra.mrb[0].mxu0 %v270
      %v409 = vpop.f32.mrb[0].mxu0
      %v410 = vadd.f32 %v227, %v409
      %v411 = vpop.f32.mrb[0].mxu0
      %412 = vmatprep.mubr.f32.mxu0 0.0
      %413 = vmatmul.mubr.f32.gmra.mrb[0].mxu0 %v273
      %v414 = vpop.f32.mrb[0].mxu0
      %v415 = vadd.f32 %v227, %v414
      %v416 = vpop.f32.mrb[0].mxu0
      %417 = vmatprep.mubr.f32.mxu0 0.0
      %418 = vmatmul.mubr.f32.gmra.mrb[0].mxu0 %v276
      %v419 = vpop.f32.mrb[0].mxu0
      %v420 = vadd.f32 %v227, %v419
      %v421 = vpop.f32.mrb[0].mxu0
      %422 = vdwg.mxu0
      %s423 = sld [smem:[#allocation2]]
      %v424 = vxor.u32 %v345, 2147483648
      %v425 = vxor.u32 %v350, 2147483648
      %v426 = vxor.u32 %v355, 2147483648
      %v427 = vxor.u32 %v360, 2147483648
      %v428 = vxor.u32 %v365, 2147483648
      %v429 = vxor.u32 %v370, 2147483648
      %v430 = vxor.u32 %v375, 2147483648
      %v431 = vxor.u32 %v380, 2147483648
      %v432 = vxor.u32 %v385, 2147483648
      %v433 = vxor.u32 %v390, 2147483648
      %v434 = vxor.u32 %v395, 2147483648
      %v435 = vxor.u32 %v400, 2147483648
      %v436 = vxor.u32 %v405, 2147483648
      %v437 = vxor.u32 %v410, 2147483648
      %v438 = vxor.u32 %v415, 2147483648
      %v439 = vxor.u32 %v420, 2147483648
      %v440 = vmul.f32 %v424, 1.442695
      %v441 = vpow.pop %v440
      %v442 = vmul.f32 %v425, 1.442695
      %v443 = vpow.pop %v442
      %v444 = vmul.f32 %v426, 1.442695
      %v445 = vpow.pop %v444
      %v446 = vmul.f32 %v427, 1.442695
      %v447 = vpow.pop %v446
      %v448 = vmul.f32 %v428, 1.442695
      %v449 = vpow.pop %v448
      %v450 = vmul.f32 %v429, 1.442695
      %v451 = vpow.pop %v450
      %v452 = vmul.f32 %v430, 1.442695
      %v453 = vpow.pop %v452
      %v454 = vmul.f32 %v431, 1.442695
      %v455 = vpow.pop %v454
      %v456 = vmul.f32 %v432, 1.442695
      %v457 = vpow.pop %v456
      %v458 = vmul.f32 %v433, 1.442695
      %v459 = vpow.pop %v458
      %v460 = vmul.f32 %v434, 1.442695
      %v461 = vpow.pop %v460
      %v462 = vmul.f32 %v435, 1.442695
      %v463 = vpow.pop %v462
      %v464 = vmul.f32 %v436, 1.442695
      %v465 = vpow.pop %v464
      %v466 = vmul.f32 %v437, 1.442695
      %v467 = vpow.pop %v466
      %v468 = vmul.f32 %v438, 1.442695
      %v469 = vpow.pop %v468
      %v470 = vmul.f32 %v439, 1.442695
      %v471 = vpow.pop %v470
      %v472 = vadd.f32 %v441, 1.0
      %v473 = vadd.f32 %v443, 1.0
      %v474 = vadd.f32 %v445, 1.0
      %v475 = vadd.f32 %v447, 1.0
      %v476 = vadd.f32 %v449, 1.0
      %v477 = vadd.f32 %v451, 1.0
      %v478 = vadd.f32 %v453, 1.0
      %v479 = vadd.f32 %v455, 1.0
      %v480 = vadd.f32 %v457, 1.0
      %v481 = vadd.f32 %v459, 1.0
      %v482 = vadd.f32 %v461, 1.0
      %v483 = vadd.f32 %v463, 1.0
      %v484 = vadd.f32 %v465, 1.0
      %v485 = vadd.f32 %v467, 1.0
      %v486 = vadd.f32 %v469, 1.0
      %v487 = vadd.f32 %v471, 1.0
      %v488 = vrcp.pop %v472
      %v489 = vmul.f32 1.0, %v488
      %v490 = vrcp.pop %v473
      %v491 = vmul.f32 1.0, %v490
      %v492 = vrcp.pop %v474
      %v493 = vmul.f32 1.0, %v492
      %v494 = vrcp.pop %v475
      %v495 = vmul.f32 1.0, %v494
      %v496 = vrcp.pop %v476
      %v497 = vmul.f32 1.0, %v496
      %v498 = vrcp.pop %v477
      %v499 = vmul.f32 1.0, %v498
      %v500 = vrcp.pop %v478
      %v501 = vmul.f32 1.0, %v500
      %v502 = vrcp.pop %v479
      %v503 = vmul.f32 1.0, %v502
      %v504 = vrcp.pop %v480
      %v505 = vmul.f32 1.0, %v504
      %v506 = vrcp.pop %v481
      %v507 = vmul.f32 1.0, %v506
      %v508 = vrcp.pop %v482
      %v509 = vmul.f32 1.0, %v508
      %v510 = vrcp.pop %v483
      %v511 = vmul.f32 1.0, %v510
      %v512 = vrcp.pop %v484
      %v513 = vmul.f32 1.0, %v512
      %v514 = vrcp.pop %v485
      %v515 = vmul.f32 1.0, %v514
      %v516 = vrcp.pop %v486
      %v517 = vmul.f32 1.0, %v516
      %v518 = vrcp.pop %v487
      %v519 = vmul.f32 1.0, %v518
      %v520 = vstv %s423
      %v521 = vmul.f32 %v489, %v520
      %v522 = vmul.f32 %v491, %v520
      %v523 = vmul.f32 %v493, %v520
      %v524 = vmul.f32 %v495, %v520
      %v525 = vmul.f32 %v497, %v520
      %v526 = vmul.f32 %v499, %v520
      %v527 = vmul.f32 %v501, %v520
      %v528 = vmul.f32 %v503, %v520
      %v529 = vmul.f32 %v505, %v520
      %v530 = vmul.f32 %v507, %v520
      %v531 = vmul.f32 %v509, %v520
      %v532 = vmul.f32 %v511, %v520
      %v533 = vmul.f32 %v513, %v520
      %v534 = vmul.f32 %v515, %v520
      %v535 = vmul.f32 %v517, %v520
      %v536 = vmul.f32 %v519, %v520
      %v537 = vadd.f32 %v521, 1.1
      %v538 = vadd.f32 %v522, 1.1
      %v539 = vadd.f32 %v523, 1.1
      %v540 = vadd.f32 %v524, 1.1
      %v541 = vadd.f32 %v525, 1.1
      %v542 = vadd.f32 %v526, 1.1
      %v543 = vadd.f32 %v527, 1.1
      %v544 = vadd.f32 %v528, 1.1
      %v545 = vadd.f32 %v529, 1.1
      %v546 = vadd.f32 %v530, 1.1
      %v547 = vadd.f32 %v531, 1.1
      %v548 = vadd.f32 %v532, 1.1
      %v549 = vadd.f32 %v533, 1.1
      %v550 = vadd.f32 %v534, 1.1
      %v551 = vadd.f32 %v535, 1.1
      %v552 = vadd.f32 %v536, 1.1
      %v553 = vlaneseq
      %v554 = vand.u32 %v553, 127
      %vm555 = vcmp.eq.s32.totalorder %v554, 0
      %v556 = vsel %vm555, 0.0, %v345
      %v557 = vsel %vm555, 0.0, %v350
      %v558 = vsel %vm555, 0.0, %v355
      %v559 = vsel %vm555, 0.0, %v360
      %v560 = vsel %vm555, 0.0, %v365
      %v561 = vsel %vm555, 0.0, %v370
      %v562 = vsel %vm555, 0.0, %v375
      %v563 = vsel %vm555, 0.0, %v380
      %v564 = vsel %vm555, 0.0, %v385
      %v565 = vsel %vm555, 0.0, %v390
      %v566 = vsel %vm555, 0.0, %v395
      %v567 = vsel %vm555, 0.0, %v400
      %v568 = vsel %vm555, 0.0, %v405
      %v569 = vsel %vm555, 0.0, %v410
      %v570 = vsel %vm555, 0.0, %v415
      %v571 = vsel %vm555, 0.0, %v420
      %v572 = vmul.f32 %v556, %v556
      %v573 = vmul.f32 %v557, %v557
      %v574 = vmul.f32 %v558, %v558
      %v575 = vmul.f32 %v559, %v559
      %v576 = vmul.f32 %v560, %v560
      %v577 = vmul.f32 %v561, %v561
      %v578 = vmul.f32 %v562, %v562
      %v579 = vmul.f32 %v563, %v563
      %v580 = vmul.f32 %v564, %v564
      %v581 = vmul.f32 %v565, %v565
      %v582 = vmul.f32 %v566, %v566
      %v583 = vmul.f32 %v567, %v567
      %v584 = vmul.f32 %v568, %v568
      %v585 = vmul.f32 %v569, %v569
      %v586 = vmul.f32 %v570, %v570
      %v587 = vmul.f32 %v571, %v571
      %588 = vadd.xlane.f32.xlu0 %v572
      %v589 = vpop.xlane.xlu0 %588
      %590 = vadd.xlane.f32.xlu0 %v573
      %v591 = vpop.xlane.xlu0 %590
      %592 = vadd.xlane.f32.xlu0 %v574
      %v593 = vpop.xlane.xlu0 %592
      %594 = vadd.xlane.f32.xlu0 %v575
      %v595 = vpop.xlane.xlu0 %594
      %596 = vadd.xlane.f32.xlu0 %v576
      %v597 = vpop.xlane.xlu0 %596
      %598 = vadd.xlane.f32.xlu0 %v577
      %v599 = vpop.xlane.xlu0 %598
      %600 = vadd.xlane.f32.xlu0 %v578
      %v601 = vpop.xlane.xlu0 %600
      %602 = vadd.xlane.f32.xlu0 %v579
      %v603 = vpop.xlane.xlu0 %602
      %604 = vadd.xlane.f32.xlu0 %v580
      %v605 = vpop.xlane.xlu0 %604
      %606 = vadd.xlane.f32.xlu0 %v581
      %v607 = vpop.xlane.xlu0 %606
      %608 = vadd.xlane.f32.xlu0 %v582
      %v609 = vpop.xlane.xlu0 %608
      %610 = vadd.xlane.f32.xlu0 %v583
      %v611 = vpop.xlane.xlu0 %610
      %612 = vadd.xlane.f32.xlu0 %v584
      %v613 = vpop.xlane.xlu0 %612
      %614 = vadd.xlane.f32.xlu0 %v585
      %v615 = vpop.xlane.xlu0 %614
      %616 = vadd.xlane.f32.xlu0 %v586
      %v617 = vpop.xlane.xlu0 %616
      %618 = vadd.xlane.f32.xlu0 %v587
      %v619 = vpop.xlane.xlu0 %618
      %v620 = vmul.f32 %v537, %v537
      %v621 = vmul.f32 %v538, %v538
      %v622 = vmul.f32 %v539, %v539
      %v623 = vmul.f32 %v540, %v540
      %v624 = vmul.f32 %v541, %v541
      %v625 = vmul.f32 %v542, %v542
      %v626 = vmul.f32 %v543, %v543
      %v627 = vmul.f32 %v544, %v544
      %v628 = vmul.f32 %v545, %v545
      %v629 = vmul.f32 %v546, %v546
      %v630 = vmul.f32 %v547, %v547
      %v631 = vmul.f32 %v548, %v548
      %v632 = vmul.f32 %v549, %v549
      %v633 = vmul.f32 %v550, %v550
      %v634 = vmul.f32 %v551, %v551
      %v635 = vmul.f32 %v552, %v552
      %v636 = vsub.f32 %v620, 1.0
      %v637 = vsub.f32 %v621, 1.0
      %v638 = vsub.f32 %v622, 1.0
      %v639 = vsub.f32 %v623, 1.0
      %v640 = vsub.f32 %v624, 1.0
      %v641 = vsub.f32 %v625, 1.0
      %v642 = vsub.f32 %v626, 1.0
      %v643 = vsub.f32 %v627, 1.0
      %v644 = vsub.f32 %v628, 1.0
      %v645 = vsub.f32 %v629, 1.0
      %v646 = vsub.f32 %v630, 1.0
      %v647 = vsub.f32 %v631, 1.0
      %v648 = vsub.f32 %v632, 1.0
      %v649 = vsub.f32 %v633, 1.0
      %v650 = vsub.f32 %v634, 1.0
      %v651 = vsub.f32 %v635, 1.0
      %v652 = vrsqrt.pop %v636
      %v653 = vmul.f32 %v636, %v652
      %vm654 = vcmp.eq.f32.partialorder %v636, inf
      %v655 = vsel %vm654, %v636, %v653
      %vm656 = vcmp.eq.f32.partialorder %v636, 0.0
      %v657 = vand.u32 %v636, 2147483648
      %v658 = vsel %vm656, %v657, %v655
      %v659 = vrsqrt.pop %v637
      %v660 = vmul.f32 %v637, %v659
      %vm661 = vcmp.eq.f32.partialorder %v637, inf
      %v662 = vsel %vm661, %v637, %v660
      %vm663 = vcmp.eq.f32.partialorder %v637, 0.0
      %v664 = vand.u32 %v637, 2147483648
      %v665 = vsel %vm663, %v664, %v662
      %v666 = vrsqrt.pop %v638
      %v667 = vmul.f32 %v638, %v666
      %vm668 = vcmp.eq.f32.partialorder %v638, inf
      %v669 = vsel %vm668, %v638, %v667
      %vm670 = vcmp.eq.f32.partialorder %v638, 0.0
      %v671 = vand.u32 %v638, 2147483648
      %v672 = vsel %vm670, %v671, %v669
      %v673 = vrsqrt.pop %v639
      %v674 = vmul.f32 %v639, %v673
      %vm675 = vcmp.eq.f32.partialorder %v639, inf
      %v676 = vsel %vm675, %v639, %v674
      %vm677 = vcmp.eq.f32.partialorder %v639, 0.0
      %v678 = vand.u32 %v639, 2147483648
      %v679 = vsel %vm677, %v678, %v676
      %v680 = vrsqrt.pop %v640
      %v681 = vmul.f32 %v640, %v680
      %vm682 = vcmp.eq.f32.partialorder %v640, inf
      %v683 = vsel %vm682, %v640, %v681
      %vm684 = vcmp.eq.f32.partialorder %v640, 0.0
      %v685 = vand.u32 %v640, 2147483648
      %v686 = vsel %vm684, %v685, %v683
      %v687 = vrsqrt.pop %v641
      %v688 = vmul.f32 %v641, %v687
      %vm689 = vcmp.eq.f32.partialorder %v641, inf
      %v690 = vsel %vm689, %v641, %v688
      %vm691 = vcmp.eq.f32.partialorder %v641, 0.0
      %v692 = vand.u32 %v641, 2147483648
      %v693 = vsel %vm691, %v692, %v690
      %v694 = vrsqrt.pop %v642
      %v695 = vmul.f32 %v642, %v694
      %vm696 = vcmp.eq.f32.partialorder %v642, inf
      %v697 = vsel %vm696, %v642, %v695
      %vm698 = vcmp.eq.f32.partialorder %v642, 0.0
      %v699 = vand.u32 %v642, 2147483648
      %v700 = vsel %vm698, %v699, %v697
      %v701 = vrsqrt.pop %v643
      %v702 = vmul.f32 %v643, %v701
      %vm703 = vcmp.eq.f32.partialorder %v643, inf
      %v704 = vsel %vm703, %v643, %v702
      %vm705 = vcmp.eq.f32.partialorder %v643, 0.0
      %v706 = vand.u32 %v643, 2147483648
      %v707 = vsel %vm705, %v706, %v704
      %v708 = vrsqrt.pop %v644
      %v709 = vmul.f32 %v644, %v708
      %vm710 = vcmp.eq.f32.partialorder %v644, inf
      %v711 = vsel %vm710, %v644, %v709
      %vm712 = vcmp.eq.f32.partialorder %v644, 0.0
      %v713 = vand.u32 %v644, 2147483648
      %v714 = vsel %vm712, %v713, %v711
      %v715 = vrsqrt.pop %v645
      %v716 = vmul.f32 %v645, %v715
      %vm717 = vcmp.eq.f32.partialorder %v645, inf
      %v718 = vsel %vm717, %v645, %v716
      %vm719 = vcmp.eq.f32.partialorder %v645, 0.0
      %v720 = vand.u32 %v645, 2147483648
      %v721 = vsel %vm719, %v720, %v718
      %v722 = vrsqrt.pop %v646
      %v723 = vmul.f32 %v646, %v722
      %vm724 = vcmp.eq.f32.partialorder %v646, inf
      %v725 = vsel %vm724, %v646, %v723
      %vm726 = vcmp.eq.f32.partialorder %v646, 0.0
      %v727 = vand.u32 %v646, 2147483648
      %v728 = vsel %vm726, %v727, %v725
      %v729 = vrsqrt.pop %v647
      %v730 = vmul.f32 %v647, %v729
      %vm731 = vcmp.eq.f32.partialorder %v647, inf
      %v732 = vsel %vm731, %v647, %v730
      %vm733 = vcmp.eq.f32.partialorder %v647, 0.0
      %v734 = vand.u32 %v647, 2147483648
      %v735 = vsel %vm733, %v734, %v732
      %v736 = vrsqrt.pop %v648
      %v737 = vmul.f32 %v648, %v736
      %vm738 = vcmp.eq.f32.partialorder %v648, inf
      %v739 = vsel %vm738, %v648, %v737
      %vm740 = vcmp.eq.f32.partialorder %v648, 0.0
      %v741 = vand.u32 %v648, 2147483648
      %v742 = vsel %vm740, %v741, %v739
      %v743 = vrsqrt.pop %v649
      %v744 = vmul.f32 %v649, %v743
      %vm745 = vcmp.eq.f32.partialorder %v649, inf
      %v746 = vsel %vm745, %v649, %v744
      %vm747 = vcmp.eq.f32.partialorder %v649, 0.0
      %v748 = vand.u32 %v649, 2147483648
      %v749 = vsel %vm747, %v748, %v746
      %v750 = vrsqrt.pop %v650
      %v751 = vmul.f32 %v650, %v750
      %vm752 = vcmp.eq.f32.partialorder %v650, inf
      %v753 = vsel %vm752, %v650, %v751
      %vm754 = vcmp.eq.f32.partialorder %v650, 0.0
      %v755 = vand.u32 %v650, 2147483648
      %v756 = vsel %vm754, %v755, %v753
      %v757 = vrsqrt.pop %v651
      %v758 = vmul.f32 %v651, %v757
      %vm759 = vcmp.eq.f32.partialorder %v651, inf
      %v760 = vsel %vm759, %v651, %v758
      %vm761 = vcmp.eq.f32.partialorder %v651, 0.0
      %v762 = vand.u32 %v651, 2147483648
      %v763 = vsel %vm761, %v762, %v760
      %v764 = vmax.f32 %v589, 1e-08
      %v765 = vmax.f32 %v591, 1e-08
      %v766 = vmax.f32 %v593, 1e-08
      %v767 = vmax.f32 %v595, 1e-08
      %v768 = vmax.f32 %v597, 1e-08
      %v769 = vmax.f32 %v599, 1e-08
      %v770 = vmax.f32 %v601, 1e-08
      %v771 = vmax.f32 %v603, 1e-08
      %v772 = vmax.f32 %v605, 1e-08
      %v773 = vmax.f32 %v607, 1e-08
      %v774 = vmax.f32 %v609, 1e-08
      %v775 = vmax.f32 %v611, 1e-08
      %v776 = vmax.f32 %v613, 1e-08
      %v777 = vmax.f32 %v615, 1e-08
      %v778 = vmax.f32 %v617, 1e-08
      %v779 = vmax.f32 %v619, 1e-08
      %v780 = vrsqrt.pop %v764
      %v781 = vrsqrt.pop %v765
      %v782 = vrsqrt.pop %v766
      %v783 = vrsqrt.pop %v767
      %v784 = vrsqrt.pop %v768
      %v785 = vrsqrt.pop %v769
      %v786 = vrsqrt.pop %v770
      %v787 = vrsqrt.pop %v771
      %v788 = vrsqrt.pop %v772
      %v789 = vrsqrt.pop %v773
      %v790 = vrsqrt.pop %v774
      %v791 = vrsqrt.pop %v775
      %v792 = vrsqrt.pop %v776
      %v793 = vrsqrt.pop %v777
      %v794 = vrsqrt.pop %v778
      %v795 = vrsqrt.pop %v779
      %v796 = vmul.f32 %v658, %v780
      %v797 = vmul.f32 %v665, %v781
      %v798 = vmul.f32 %v672, %v782
      %v799 = vmul.f32 %v679, %v783
      %v800 = vmul.f32 %v686, %v784
      %v801 = vmul.f32 %v693, %v785
      %v802 = vmul.f32 %v700, %v786
      %v803 = vmul.f32 %v707, %v787
      %v804 = vmul.f32 %v714, %v788
      %v805 = vmul.f32 %v721, %v789
      %v806 = vmul.f32 %v728, %v790
      %v807 = vmul.f32 %v735, %v791
      %v808 = vmul.f32 %v742, %v792
      %v809 = vmul.f32 %v749, %v793
      %v810 = vmul.f32 %v756, %v794
      %v811 = vmul.f32 %v763, %v795
      %813 = vset.pattern.permute.xlu0 0
      %814 = vperm.xlu0 %813, %v796
      %v815 = vpop.permute.xlu0 %814
      %818 = vset.pattern.permute.xlu0 0
      %819 = vperm.xlu0 %818, %v797
      %v820 = vpop.permute.xlu0 %819
      %823 = vset.pattern.permute.xlu0 0
      %824 = vperm.xlu0 %823, %v798
      %v825 = vpop.permute.xlu0 %824
      %828 = vset.pattern.permute.xlu0 0
      %829 = vperm.xlu0 %828, %v799
      %v830 = vpop.permute.xlu0 %829
      %833 = vset.pattern.permute.xlu0 0
      %834 = vperm.xlu0 %833, %v800
      %v835 = vpop.permute.xlu0 %834
      %838 = vset.pattern.permute.xlu0 0
      %839 = vperm.xlu0 %838, %v801
      %v840 = vpop.permute.xlu0 %839
      %843 = vset.pattern.permute.xlu0 0
      %844 = vperm.xlu0 %843, %v802
      %v845 = vpop.permute.xlu0 %844
      %848 = vset.pattern.permute.xlu0 0
      %849 = vperm.xlu0 %848, %v803
      %v850 = vpop.permute.xlu0 %849
      %853 = vset.pattern.permute.xlu0 0
      %854 = vperm.xlu0 %853, %v804
      %v855 = vpop.permute.xlu0 %854
      %858 = vset.pattern.permute.xlu0 0
      %859 = vperm.xlu0 %858, %v805
      %v860 = vpop.permute.xlu0 %859
      %863 = vset.pattern.permute.xlu0 0
      %864 = vperm.xlu0 %863, %v806
      %v865 = vpop.permute.xlu0 %864
      %868 = vset.pattern.permute.xlu0 0
      %869 = vperm.xlu0 %868, %v807
      %v870 = vpop.permute.xlu0 %869
      %873 = vset.pattern.permute.xlu0 0
      %874 = vperm.xlu0 %873, %v808
      %v875 = vpop.permute.xlu0 %874
      %878 = vset.pattern.permute.xlu0 0
      %879 = vperm.xlu0 %878, %v809
      %v880 = vpop.permute.xlu0 %879
      %883 = vset.pattern.permute.xlu0 0
      %884 = vperm.xlu0 %883, %v810
      %v885 = vpop.permute.xlu0 %884
      %888 = vset.pattern.permute.xlu0 0
      %889 = vperm.xlu0 %888, %v811
      %v890 = vpop.permute.xlu0 %889
      %v892 = vmul.f32 %v556, %v815
      %v893 = vmul.f32 %v557, %v820
      %v894 = vmul.f32 %v558, %v825
      %v895 = vmul.f32 %v559, %v830
      %v896 = vmul.f32 %v560, %v835
      %v897 = vmul.f32 %v561, %v840
      %v898 = vmul.f32 %v562, %v845
      %v899 = vmul.f32 %v563, %v850
      %v900 = vmul.f32 %v564, %v855
      %v901 = vmul.f32 %v565, %v860
      %v902 = vmul.f32 %v566, %v865
      %v903 = vmul.f32 %v567, %v870
      %v904 = vmul.f32 %v568, %v875
      %v905 = vmul.f32 %v569, %v880
      %v906 = vmul.f32 %v570, %v885
      %v907 = vmul.f32 %v571, %v890
      %909 = vset.pattern.permute.xlu0 0
      %910 = vperm.xlu0 %909, %v537
      %v911 = vpop.permute.xlu0 %910
      %914 = vset.pattern.permute.xlu0 0
      %915 = vperm.xlu0 %914, %v538
      %v916 = vpop.permute.xlu0 %915
      %919 = vset.pattern.permute.xlu0 0
      %920 = vperm.xlu0 %919, %v539
      %v921 = vpop.permute.xlu0 %920
      %924 = vset.pattern.permute.xlu0 0
      %925 = vperm.xlu0 %924, %v540
      %v926 = vpop.permute.xlu0 %925
      %929 = vset.pattern.permute.xlu0 0
      %930 = vperm.xlu0 %929, %v541
      %v931 = vpop.permute.xlu0 %930
      %934 = vset.pattern.permute.xlu0 0
      %935 = vperm.xlu0 %934, %v542
      %v936 = vpop.permute.xlu0 %935
      %939 = vset.pattern.permute.xlu0 0
      %940 = vperm.xlu0 %939, %v543
      %v941 = vpop.permute.xlu0 %940
      %944 = vset.pattern.permute.xlu0 0
      %945 = vperm.xlu0 %944, %v544
      %v946 = vpop.permute.xlu0 %945
      %949 = vset.pattern.permute.xlu0 0
      %950 = vperm.xlu0 %949, %v545
      %v951 = vpop.permute.xlu0 %950
      %954 = vset.pattern.permute.xlu0 0
      %955 = vperm.xlu0 %954, %v546
      %v956 = vpop.permute.xlu0 %955
      %959 = vset.pattern.permute.xlu0 0
      %960 = vperm.xlu0 %959, %v547
      %v961 = vpop.permute.xlu0 %960
      %964 = vset.pattern.permute.xlu0 0
      %965 = vperm.xlu0 %964, %v548
      %v966 = vpop.permute.xlu0 %965
      %969 = vset.pattern.permute.xlu0 0
      %970 = vperm.xlu0 %969, %v549
      %v971 = vpop.permute.xlu0 %970
      %974 = vset.pattern.permute.xlu0 0
      %975 = vperm.xlu0 %974, %v550
      %v976 = vpop.permute.xlu0 %975
      %979 = vset.pattern.permute.xlu0 0
      %980 = vperm.xlu0 %979, %v551
      %v981 = vpop.permute.xlu0 %980
      %984 = vset.pattern.permute.xlu0 0
      %985 = vperm.xlu0 %984, %v552
      %v986 = vpop.permute.xlu0 %985
      %v988 = vsel %vm555, %v911, %v892
      %v989 = vsel %vm555, %v916, %v893
      %v990 = vsel %vm555, %v921, %v894
      %v991 = vsel %vm555, %v926, %v895
      %v992 = vsel %vm555, %v931, %v896
      %v993 = vsel %vm555, %v936, %v897
      %v994 = vsel %vm555, %v941, %v898
      %v995 = vsel %vm555, %v946, %v899
      %v996 = vsel %vm555, %v951, %v900
      %v997 = vsel %vm555, %v956, %v901
      %v998 = vsel %vm555, %v961, %v902
      %v999 = vsel %vm555, %v966, %v903
      %v1000 = vsel %vm555, %v971, %v904
      %v1001 = vsel %vm555, %v976, %v905
      %v1002 = vsel %vm555, %v981, %v906
      %v1003 = vsel %vm555, %v986, %v907
      %1004 = vst [vmem:[%s200] sm:$0xff] %v988
      %1005 = vst [vmem:[%s200 + $0x8] sm:$0xff] %v989
      %1006 = vst [vmem:[%s200 + $0x10] sm:$0xff] %v990
      %1007 = vst [vmem:[%s200 + $0x18] sm:$0xff] %v991
      %1008 = vst [vmem:[%s200 + $0x20] sm:$0xff] %v992
      %1009 = vst [vmem:[%s200 + $0x28] sm:$0xff] %v993
      %1010 = vst [vmem:[%s200 + $0x30] sm:$0xff] %v994
      %1011 = vst [vmem:[%s200 + $0x38] sm:$0xff] %v995
      %1012 = vst [vmem:[%s200 + $0x40] sm:$0xff] %v996
      %1013 = vst [vmem:[%s200 + $0x48] sm:$0xff] %v997
      %1014 = vst [vmem:[%s200 + $0x50] sm:$0xff] %v998
      %1015 = vst [vmem:[%s200 + $0x58] sm:$0xff] %v999
      %1016 = vst [vmem:[%s200 + $0x60] sm:$0xff] %v1000
      %1017 = vst [vmem:[%s200 + $0x68] sm:$0xff] %v1001
      %1018 = vst [vmem:[%s200 + $0x70] sm:$0xff] %v1002
      %1019 = vst [vmem:[%s200 + $0x78] sm:$0xff] %v1003
      %s1020 = smul.u32 16, %s16
      %p1021 = scmp.lt.s32.totalorder %s1020, 31
      %s1022 = scalar_select %p1021, %s1020, 31
      %s1023 = smul.addr %s1022, 8
      %s1024 = scalar_lea.vmem %s4, %s1023
      // Predicated region
      $region37: #{lorentz_graph_convolution.2} parent=35 // pred_check
        %p1025 = pneg %p123
      $region38: #{lorentz_graph_convolution.2} parent=35 // pred_check_branch
        %1027 = sbr.rel (%p1025) target = $region40
      $region39: #{lorentz_graph_convolution.2} parent=35 // pred_region
        %s1028 = smul.u32 16, %s16
      $region40: #{lorentz_graph_convolution.2} parent=35 // pred_fallthru
        _
    $region36: #{lorentz_graph_convolution.2} parent=5 // pred_fallthru
      _
    %p1029 = scmp.le.s32.totalorder 2, %s11
    // Predicated region
    $region41: #{lorentz_graph_convolution.2} parent=5 // pred_check
      %p1030 = pneg %p1029
    $region42: #{lorentz_graph_convolution.2} parent=5 // pred_check_branch
      %1032 = sbr.rel (%p1030) target = $region44
    $region43: #{lorentz_graph_convolution.2} parent=5 // pred_region
      %s1033 = ssub.s32 %s11, 2
      // Predicated region
      $region45: #{lorentz_graph_convolution.2} parent=43 // pred_check
        %p1034 = pneg %p129
      $region46: #{lorentz_graph_convolution.2} parent=43 // pred_check_branch
        %1036 = sbr.rel (%p1034) target = $region48
      $region47: #{lorentz_graph_convolution.2} parent=43 // pred_region
        %s1037 = smul.u32 16, %s17
        %p1038 = scmp.lt.s32.totalorder %s1037, 31
        %s1039 = scalar_select %p1038, %s1037, 31
        %s1040 = smul.addr %s1039, 8
        %s1041 = scalar_lea.vmem %s4, %s1040
      $region48: #{lorentz_graph_convolution.2} parent=43 // pred_fallthru
        _
    $region44: #{lorentz_graph_convolution.2} parent=5 // pred_fallthru
      _
  $region6: #{lorentz_graph_convolution.2} parent=0 // loop_footer
    %s15 = sadd.s32 1, %s11
  $region7: #{lorentz_graph_convolution.2} parent=0 // loop_footer_branch
    %10 = sbr.rel target = $region3
  $region8: #{lorentz_graph_convolution.2} parent=0 // loop_exit
    _

</llo_original>
